<compile_context>
chip_gen: v6e
topology: v6e:2x2x1
jax: 0.10.0
libtpu: 0.0.40
codegen_flags: <defaults>
</compile_context>

<pallas_src>
import jax
import jax.numpy as jnp
import numpy as np
from jax.experimental import pallas as pl
from jax.experimental.pallas import tpu as pltpu


def _attention_concept_kernel(keys_ref, values_ref, qh_ref, wxt_ref, w_ref,
                              out_ref, m_scr, l_scr, acc_scr):
    """One grid step: TB batch rows x TL key/value rows, online softmax over L."""
    tb, tl, din = keys_ref.shape
    _, m = qh_ref.shape
    li = pl.program_id(1)

    @pl.when(li == 0)
    def _init():
        m_scr[...] = jnp.full(m_scr.shape, -jnp.inf, m_scr.dtype)
        l_scr[...] = jnp.zeros(l_scr.shape, l_scr.dtype)
        acc_scr[...] = jnp.zeros(acc_scr.shape, acc_scr.dtype)

    # wx(keys): one MXU matmul covering all TB batches of this block.
    # (tb*tl, Din) @ (Din, M) with bf16 operands, f32 accumulation.
    keys2d = keys_ref[...].reshape(tb * tl, din)
    kx = jnp.dot(keys2d, wxt_ref[...], preferred_element_type=jnp.float32)
    kx = kx.reshape(tb, tl, m)                                        # (tb, tl, M)

    # g = relu(kx + qh) and the M-contraction stay in f32 on the VPU.
    qh = qh_ref[...]                                                  # (Q, M) f32
    g = jnp.maximum(kx[:, None, :, :] + qh[None, :, None, :], 0.0)    # (tb, Q, tl, M)
    s = jnp.sum(g * w_ref[...], axis=-1)                              # (tb, Q, tl)

    # Online (flash-style) softmax over the L axis.
    m_new = jnp.maximum(m_scr[...], jnp.max(s, axis=-1, keepdims=True))
    alpha = jnp.exp(m_scr[...] - m_new)
    p = jnp.exp(s - m_new)
    l_scr[...] = alpha * l_scr[...] + jnp.sum(p, axis=-1, keepdims=True)
    acc_scr[...] = alpha * acc_scr[...] + jnp.einsum(
        'bql,blv->bqv', p.astype(values_ref.dtype), values_ref[...],
        preferred_element_type=jnp.float32)
    m_scr[...] = m_new

    @pl.when(li == pl.num_programs(1) - 1)
    def _finalize():
        inv_l = pl.reciprocal(l_scr[...], approx=True)
        out_ref[...] = (acc_scr[...] * inv_l).astype(out_ref.dtype)


def attention_concept(query, keys, values, wx_w, wh_w, wh_b, w_w, *,
                      block_b=None, block_l=None):
    """
    query : (Q, Dh)
    keys  : (B, L, Din)
    values: (B, L, Dv)
    wx_w  : (M, Din)   (PyTorch Linear weight layout, no bias)
    wh_w  : (M, Dh)
    wh_b  : (M,)
    w_w   : (1, M)
    returns (B, Q, Dv) float32
    """
    B, L, Din = keys.shape
    Q, _ = query.shape
    Dv = values.shape[-1]
    M = wx_w.shape[0]

    tb = B if block_b is None else block_b
    tl = L if block_l is None else block_l
    assert B % tb == 0, (B, tb)
    assert L % tl == 0, (L, tl)

    # Hoisted batch-invariant query projection: computed exactly once in f32
    # (previously re-run on the MXU once per batch element).
    qh = (jnp.asarray(query, jnp.float32) @ jnp.asarray(wh_w, jnp.float32).T
          + jnp.asarray(wh_b, jnp.float32)[None, :])                   # (Q, M)

    # bf16 operands for the MXU matmuls (halves HBM->VMEM traffic on v6e/v7x);
    # all elementwise / softmax math stays in f32 inside the kernel.
    keys_bf = jnp.asarray(keys, jnp.float32).astype(jnp.bfloat16)
    values_bf = jnp.asarray(values, jnp.float32).astype(jnp.bfloat16)
    wx_t = jnp.asarray(wx_w, jnp.float32).T.astype(jnp.bfloat16)       # (Din, M)
    w = jnp.asarray(w_w, jnp.float32).reshape(1, M)                    # (1, M)

    grid = (B // tb, L // tl)
    grid_spec = pltpu.PrefetchScalarGridSpec(
        num_scalar_prefetch=0,
        grid=grid,
        in_specs=[
            pl.BlockSpec((tb, tl, Din), lambda b, l: (b, l, 0)),   # keys block
            pl.BlockSpec((tb, tl, Dv), lambda b, l: (b, l, 0)),    # values block
            pl.BlockSpec((Q, M), lambda b, l: (0, 0)),             # qh (shared)
            pl.BlockSpec((Din, M), lambda b, l: (0, 0)),           # wx^T (shared)
            pl.BlockSpec((1, M), lambda b, l: (0, 0)),             # w (shared)
        ],
        out_specs=pl.BlockSpec((tb, Q, Dv), lambda b, l: (b, 0, 0)),
        scratch_shapes=[
            pltpu.VMEM((tb, Q, 1), jnp.float32),    # running max
            pltpu.VMEM((tb, Q, 1), jnp.float32),    # running softmax denom
            pltpu.VMEM((tb, Q, Dv), jnp.float32),   # output accumulator
        ],
    )

    return pl.pallas_call(
        _attention_concept_kernel,
        out_shape=jax.ShapeDtypeStruct((B, Q, Dv), jnp.float32),
        grid_spec=grid_spec,
        compiler_params=pltpu.CompilerParams(
            dimension_semantics=("parallel", "arbitrary"),
            vmem_limit_bytes=32 * 1024 * 1024,
        ),
    )(keys_bf, values_bf, qh, wx_t, w)


def attention_concept_ref(query, keys, values, wx_w, wh_w, wh_b, w_w):
    """Pure-JAX f32 reference mirroring the PyTorch forward (mode='concept')."""
    kx = jnp.einsum('bld,md->blm', keys, wx_w)                    # wx(keys)
    qh = jnp.einsum('qd,md->qm', query, wh_w) + wh_b              # wh(query)
    g = jax.nn.relu(kx[:, None, :, :] + qh[None, :, None, :])     # (B,Q,L,M)
    scores = jnp.einsum('bqlm,om->bqlo', g, w_w)[..., 0]          # (B,Q,L)
    e = jax.nn.softmax(scores, axis=2)                            # softmax over L
    return jnp.einsum('bql,blv->bqv', e, values)                  # bmm(e, values)


if __name__ == "__main__":
    # Small shapes consistent with the module's forward; large enough that both
    # the batch-block axis and the online-softmax L axis take multiple grid steps.
    B, L, Q = 4, 32, 8
    dim_in, dim_h, dim_middle, dim_v = 16, 32, 32, 16

    key = jax.random.PRNGKey(0)
    k_q, k_k, k_v, k_wx, k_wh, k_bh, k_w = jax.random.split(key, 7)

    query = jax.random.normal(k_q, (Q, dim_h), jnp.float32)
    keys = jax.random.normal(k_k, (B, L, dim_in), jnp.float32)
    values = jax.random.normal(k_v, (B, L, dim_v), jnp.float32)

    # deterministic parameter init (PyTorch Linear weight layouts: (out, in))
    wx_w = 0.1 * jax.random.normal(k_wx, (dim_middle, dim_in), jnp.float32)
    wh_w = 0.1 * jax.random.normal(k_wh, (dim_middle, dim_h), jnp.float32)
    wh_b = 0.1 * jax.random.normal(k_bh, (dim_middle,), jnp.float32)
    w_w = 0.1 * jax.random.normal(k_w, (1, dim_middle), jnp.float32)

    # block_b=2, block_l=16 -> grid (2, 2): exercises the "parallel" batch-block
    # axis and the online-softmax accumulation across two L tiles.
    out = attention_concept(query, keys, values, wx_w, wh_w, wh_b, w_w,
                            block_b=2, block_l=16)
    out = jax.block_until_ready(out)

    ref = attention_concept_ref(query, keys, values, wx_w, wh_w, wh_b, w_w)
    # bf16 MXU operands + approx reciprocal => looser tolerance than the pure-f32 path.
    np.testing.assert_allclose(np.asarray(out), np.asarray(ref), rtol=2e-2, atol=2e-2)

    print("KERNEL_OK")
</pallas_src>

<mosaic_0001>
module attributes {stable_mosaic.version = 11 : i64} {
  func.func @_attention_concept_kernel(%arg0: i32, %arg1: i32, %arg2: memref<2x16x16xbf16, #tpu.memory_space<vmem>>, %arg3: memref<2x16x16xbf16, #tpu.memory_space<vmem>>, %arg4: memref<8x32xf32, #tpu.memory_space<vmem>>, %arg5: memref<16x32xbf16, #tpu.memory_space<vmem>>, %arg6: memref<1x32xf32, #tpu.memory_space<vmem>>, %arg7: memref<2x8x16xf32, #tpu.memory_space<vmem>>, %arg8: memref<2x8x1xf32, #tpu.memory_space<vmem>>, %arg9: memref<2x8x1xf32, #tpu.memory_space<vmem>>, %arg10: memref<2x8x16xf32, #tpu.memory_space<vmem>>) attributes {dimension_semantics = [#tpu.dimension_semantics<parallel>, #tpu.dimension_semantics<arbitrary>], iteration_bounds = array<i64: 2, 2>, scalar_prefetch = 0 : i64, scratch_operands = 3 : i64, tpu.core_type = #tpu.core_type<tc>, window_params = [{transform_indices = @transform_0, window_bounds = array<i64: 2, 16, 16>}, {transform_indices = @transform_1, window_bounds = array<i64: 2, 16, 16>}, {pipeline_mode = #tpu.pipeline_mode<synchronous>, transform_indices = @transform_2, window_bounds = array<i64: 8, 32>}, {pipeline_mode = #tpu.pipeline_mode<synchronous>, transform_indices = @transform_3, window_bounds = array<i64: 16, 32>}, {pipeline_mode = #tpu.pipeline_mode<synchronous>, transform_indices = @transform_4, window_bounds = array<i64: 1, 32>}, {transform_indices = @transform_5, window_bounds = array<i64: 2, 8, 16>}]} {
    %c0_i32 = arith.constant 0 : i32
    %0 = arith.cmpi eq, %arg1, %c0_i32 : i32
    %1 = arith.extui %0 : i1 to i32
    %c0_i32_0 = arith.constant 0 : i32
    %2 = arith.cmpi ne, %1, %c0_i32_0 : i32
    scf.if %2 {
      %cst_39 = arith.constant 0xFF800000 : f32
      %49 = vector.broadcast %cst_39 : f32 to vector<2x8x1xf32>
      %c0_40 = arith.constant 0 : index
      %c0_41 = arith.constant 0 : index
      %c0_42 = arith.constant 0 : index
      %50 = vector.load %arg8[%c0_40, %c0_41, %c0_42] : memref<2x8x1xf32, #tpu.memory_space<vmem>>, vector<2x8x1xf32>
      tpu.vector_store %arg8[%c0_40, %c0_41, %c0_42], %49 {strides = array<i32>} : memref<2x8x1xf32, #tpu.memory_space<vmem>>, vector<2x8x1xf32>,
      %cst_43 = arith.constant 0.000000e+00 : f32
      %51 = vector.broadcast %cst_43 : f32 to vector<2x8x1xf32>
      %c0_44 = arith.constant 0 : index
      %c0_45 = arith.constant 0 : index
      %c0_46 = arith.constant 0 : index
      %52 = vector.load %arg9[%c0_44, %c0_45, %c0_46] : memref<2x8x1xf32, #tpu.memory_space<vmem>>, vector<2x8x1xf32>
      tpu.vector_store %arg9[%c0_44, %c0_45, %c0_46], %51 {strides = array<i32>} : memref<2x8x1xf32, #tpu.memory_space<vmem>>, vector<2x8x1xf32>,
      %cst_47 = arith.constant 0.000000e+00 : f32
      %53 = vector.broadcast %cst_47 : f32 to vector<2x8x16xf32>
      %c0_48 = arith.constant 0 : index
      %c0_49 = arith.constant 0 : index
      %c0_50 = arith.constant 0 : index
      %54 = vector.load %arg10[%c0_48, %c0_49, %c0_50] : memref<2x8x16xf32, #tpu.memory_space<vmem>>, vector<2x8x16xf32>
      tpu.vector_store %arg10[%c0_48, %c0_49, %c0_50], %53 {strides = array<i32>} : memref<2x8x16xf32, #tpu.memory_space<vmem>>, vector<2x8x16xf32>,
    } else {
    }
    %c0 = arith.constant 0 : index
    %c0_1 = arith.constant 0 : index
    %c0_2 = arith.constant 0 : index
    %3 = vector.load %arg2[%c0, %c0_1, %c0_2] : memref<2x16x16xbf16, #tpu.memory_space<vmem>>, vector<2x16x16xbf16>
    %4 = vector.shape_cast %3 : vector<2x16x16xbf16> to vector<32x16xbf16>
    %c0_3 = arith.constant 0 : index
    %c0_4 = arith.constant 0 : index
    %5 = vector.load %arg5[%c0_3, %c0_4] : memref<16x32xbf16, #tpu.memory_space<vmem>>, vector<16x32xbf16>
    %cst = arith.constant dense<0.000000e+00> : vector<32x32xf32>
    %6 = tpu.matmul %4, %5, %cst {dimension_numbers = #tpu.dot_dimension_numbers<[1], [0], [0], [1], [0, 0, 1, 1], [], []>} : vector<32x16xbf16>, vector<16x32xbf16>, vector<32x32xf32> -> vector<32x32xf32>
    %7 = vector.shape_cast %6 : vector<32x32xf32> to vector<2x16x32xf32>
    %c0_5 = arith.constant 0 : index
    %c0_6 = arith.constant 0 : index
    %8 = vector.load %arg4[%c0_5, %c0_6] : memref<8x32xf32, #tpu.memory_space<vmem>>, vector<8x32xf32>
    %9 = vector.shape_cast %7 : vector<2x16x32xf32> to vector<2x1x16x32xf32>
    %10 = vector.shape_cast %8 : vector<8x32xf32> to vector<1x8x1x32xf32>
    %11 = vector.broadcast %9 : vector<2x1x16x32xf32> to vector<2x8x16x32xf32>
    %12 = vector.broadcast %10 : vector<1x8x1x32xf32> to vector<2x8x16x32xf32>
    %13 = arith.addf %11, %12 : vector<2x8x16x32xf32>
    %cst_7 = arith.constant 0.000000e+00 : f32
    %14 = vector.broadcast %cst_7 : f32 to vector<2x8x16x32xf32>
    %15 = arith.maximumf %13, %14 : vector<2x8x16x32xf32>
    %c0_8 = arith.constant 0 : index
    %c0_9 = arith.constant 0 : index
    %16 = vector.load %arg6[%c0_8, %c0_9] : memref<1x32xf32, #tpu.memory_space<vmem>>, vector<1x32xf32>
    %17 = vector.shape_cast %16 : vector<1x32xf32> to vector<1x1x1x32xf32>
    %18 = vector.broadcast %17 : vector<1x1x1x32xf32> to vector<2x8x16x32xf32>
    %19 = arith.mulf %15, %18 : vector<2x8x16x32xf32>
    %cst_10 = arith.constant dense<0.000000e+00> : vector<2x8x16xf32>
    %20 = vector.multi_reduction <add>, %19, %cst_10 [3] : vector<2x8x16x32xf32> to vector<2x8x16xf32>
    %c0_11 = arith.constant 0 : index
    %c0_12 = arith.constant 0 : index
    %c0_13 = arith.constant 0 : index
    %21 = vector.load %arg8[%c0_11, %c0_12, %c0_13] : memref<2x8x1xf32, #tpu.memory_space<vmem>>, vector<2x8x1xf32>
    %cst_14 = arith.constant dense<0xFF800000> : vector<2x8xf32>
    %22 = vector.multi_reduction <maximumf>, %20, %cst_14 [2] : vector<2x8x16xf32> to vector<2x8xf32>
    %23 = vector.shape_cast %22 : vector<2x8xf32> to vector<2x8x1xf32>
    %24 = arith.maximumf %21, %23 : vector<2x8x1xf32>
    %c0_15 = arith.constant 0 : index
    %c0_16 = arith.constant 0 : index
    %c0_17 = arith.constant 0 : index
    %25 = vector.load %arg8[%c0_15, %c0_16, %c0_17] : memref<2x8x1xf32, #tpu.memory_space<vmem>>, vector<2x8x1xf32>
    %26 = arith.subf %25, %24 : vector<2x8x1xf32>
    %27 = math.exp %26 : vector<2x8x1xf32>
    %28 = vector.broadcast %24 : vector<2x8x1xf32> to vector<2x8x16xf32>
    %29 = arith.subf %20, %28 : vector<2x8x16xf32>
    %30 = math.exp %29 : vector<2x8x16xf32>
    %c0_18 = arith.constant 0 : index
    %c0_19 = arith.constant 0 : index
    %c0_20 = arith.constant 0 : index
    %31 = vector.load %arg9[%c0_18, %c0_19, %c0_20] : memref<2x8x1xf32, #tpu.memory_space<vmem>>, vector<2x8x1xf32>
    %32 = arith.mulf %27, %31 : vector<2x8x1xf32>
    %cst_21 = arith.constant dense<0.000000e+00> : vector<2x8xf32>
    %33 = vector.multi_reduction <add>, %30, %cst_21 [2] : vector<2x8x16xf32> to vector<2x8xf32>
    %34 = vector.shape_cast %33 : vector<2x8xf32> to vector<2x8x1xf32>
    %35 = arith.addf %32, %34 : vector<2x8x1xf32>
    %c0_22 = arith.constant 0 : index
    %c0_23 = arith.constant 0 : index
    %c0_24 = arith.constant 0 : index
    %36 = vector.load %arg9[%c0_22, %c0_23, %c0_24] : memref<2x8x1xf32, #tpu.memory_space<vmem>>, vector<2x8x1xf32>
    tpu.vector_store %arg9[%c0_22, %c0_23, %c0_24], %35 {strides = array<i32>} : memref<2x8x1xf32, #tpu.memory_space<vmem>>, vector<2x8x1xf32>,
    %c0_25 = arith.constant 0 : index
    %c0_26 = arith.constant 0 : index
    %c0_27 = arith.constant 0 : index
    %37 = vector.load %arg10[%c0_25, %c0_26, %c0_27] : memref<2x8x16xf32, #tpu.memory_space<vmem>>, vector<2x8x16xf32>
    %38 = vector.broadcast %27 : vector<2x8x1xf32> to vector<2x8x16xf32>
    %39 = arith.mulf %38, %37 : vector<2x8x16xf32>
    %40 = arith.truncf %30 : vector<2x8x16xf32> to vector<2x8x16xbf16>
    %c0_28 = arith.constant 0 : index
    %c0_29 = arith.constant 0 : index
    %c0_30 = arith.constant 0 : index
    %41 = vector.load %arg3[%c0_28, %c0_29, %c0_30] : memref<2x16x16xbf16, #tpu.memory_space<vmem>>, vector<2x16x16xbf16>
    "tpu.trace_start"() <{level = 10 : i32, message = "bql,blv->bqv"}> : () -> ()
    %cst_31 = arith.constant dense<0.000000e+00> : vector<2x8x16xf32>
    %42 = tpu.matmul %40, %41, %cst_31 {dimension_numbers = #tpu.dot_dimension_numbers<[2], [1], [1], [2], [0, 0, 0, 1, 1, 2], [0], [0]>} : vector<2x8x16xbf16>, vector<2x16x16xbf16>, vector<2x8x16xf32> -> vector<2x8x16xf32>
    "tpu.trace_stop"() : () -> ()
    %43 = arith.addf %39, %42 : vector<2x8x16xf32>
    %c0_32 = arith.constant 0 : index
    %c0_33 = arith.constant 0 : index
    %c0_34 = arith.constant 0 : index
    %44 = vector.load %arg10[%c0_32, %c0_33, %c0_34] : memref<2x8x16xf32, #tpu.memory_space<vmem>>, vector<2x8x16xf32>
    tpu.vector_store %arg10[%c0_32, %c0_33, %c0_34], %43 {strides = array<i32>} : memref<2x8x16xf32, #tpu.memory_space<vmem>>, vector<2x8x16xf32>,
    %c0_35 = arith.constant 0 : index
    %c0_36 = arith.constant 0 : index
    %c0_37 = arith.constant 0 : index
    %45 = vector.load %arg8[%c0_35, %c0_36, %c0_37] : memref<2x8x1xf32, #tpu.memory_space<vmem>>, vector<2x8x1xf32>
    tpu.vector_store %arg8[%c0_35, %c0_36, %c0_37], %24 {strides = array<i32>} : memref<2x8x1xf32, #tpu.memory_space<vmem>>, vector<2x8x1xf32>,
    %c1_i32 = arith.constant 1 : i32
    %46 = arith.cmpi eq, %arg1, %c1_i32 : i32
    %47 = arith.extui %46 : i1 to i32
    %c0_i32_38 = arith.constant 0 : i32
    %48 = arith.cmpi ne, %47, %c0_i32_38 : i32
    scf.if %48 {
      %c0_39 = arith.constant 0 : index
      %c0_40 = arith.constant 0 : index
      %c0_41 = arith.constant 0 : index
      %49 = vector.load %arg9[%c0_39, %c0_40, %c0_41] : memref<2x8x1xf32, #tpu.memory_space<vmem>>, vector<2x8x1xf32>
      %50 = tpu.reciprocal %49 {approx = true} : vector<2x8x1xf32> -> vector<2x8x1xf32>
      %c0_42 = arith.constant 0 : index
      %c0_43 = arith.constant 0 : index
      %c0_44 = arith.constant 0 : index
      %51 = vector.load %arg10[%c0_42, %c0_43, %c0_44] : memref<2x8x16xf32, #tpu.memory_space<vmem>>, vector<2x8x16xf32>
      %52 = vector.broadcast %50 : vector<2x8x1xf32> to vector<2x8x16xf32>
      %53 = arith.mulf %51, %52 : vector<2x8x16xf32>
      %c0_45 = arith.constant 0 : index
      %c0_46 = arith.constant 0 : index
      %c0_47 = arith.constant 0 : index
      %54 = vector.load %arg7[%c0_45, %c0_46, %c0_47] : memref<2x8x16xf32, #tpu.memory_space<vmem>>, vector<2x8x16xf32>
      tpu.vector_store %arg7[%c0_45, %c0_46, %c0_47], %53 {strides = array<i32>} : memref<2x8x16xf32, #tpu.memory_space<vmem>>, vector<2x8x16xf32>,
    } else {
    }
    return
  }
  func.func @transform_0(%arg0: i32, %arg1: i32) -> (i32, i32, i32) {
    %c0_i32 = arith.constant 0 : i32
    %c0_i32_0 = arith.constant 0 : i32
    return %arg0, %arg1, %c0_i32 : i32, i32, i32
  }
  func.func @transform_1(%arg0: i32, %arg1: i32) -> (i32, i32, i32) {
    %c0_i32 = arith.constant 0 : i32
    %c0_i32_0 = arith.constant 0 : i32
    return %arg0, %arg1, %c0_i32 : i32, i32, i32
  }
  func.func @transform_2(%arg0: i32, %arg1: i32) -> (i32, i32) {
    %c0_i32 = arith.constant 0 : i32
    %c0_i32_0 = arith.constant 0 : i32
    %c0_i32_1 = arith.constant 0 : i32
    return %c0_i32, %c0_i32_0 : i32, i32
  }
  func.func @transform_3(%arg0: i32, %arg1: i32) -> (i32, i32) {
    %c0_i32 = arith.constant 0 : i32
    %c0_i32_0 = arith.constant 0 : i32
    %c0_i32_1 = arith.constant 0 : i32
    return %c0_i32, %c0_i32_0 : i32, i32
  }
  func.func @transform_4(%arg0: i32, %arg1: i32) -> (i32, i32) {
    %c0_i32 = arith.constant 0 : i32
    %c0_i32_0 = arith.constant 0 : i32
    %c0_i32_1 = arith.constant 0 : i32
    return %c0_i32, %c0_i32_0 : i32, i32
  }
  func.func @transform_5(%arg0: i32, %arg1: i32) -> (i32, i32, i32) {
    %c0_i32 = arith.constant 0 : i32
    %c0_i32_0 = arith.constant 0 : i32
    %c0_i32_1 = arith.constant 0 : i32
    return %arg0, %c0_i32, %c0_i32_0 : i32, i32, i32
  }
}

</mosaic_0001>

<llo_original>
// kernel: tpu_custom_call.1
$region0: #{tpu_custom_call.1}
  #allocation0 [shape = 'u32[]', space=smem, size = 0x4, offset = 0x4, fixed_abs, tag = 'smem constant byte address 0x4 - core index']
  #allocation1 [shape = 'u32[144,128]{1,0:T(1,128)}', space=vmem, size = 0x12000, scoped, tag = 'internal scratch']
  #allocation2 [shape = 'f32[2,8,1]{2,1,0:T(8,128)}', space=vmem, size = 0x2000, scoped, tag = 'scratch operand']
  #allocation3 [shape = 'f32[2,8,1]{2,1,0:T(8,128)}', space=vmem, size = 0x2000, scoped, tag = 'scratch operand']
  #allocation4 [shape = 'f32[2,8,16]{2,1,0:T(8,128)}', space=vmem, size = 0x2000, scoped, tag = 'scratch operand']
  %s0 = inlined_call_operand.vmem [shape: bf16[4,32,16], index: 0, kind: input, shape index: {}]
  %s1 = inlined_call_operand.vmem [shape: bf16[4,32,16], index: 1, kind: input, shape index: {}]
  %s2 = inlined_call_operand.vmem [shape: f32[8,32], index: 2, kind: input, shape index: {}]
  %s3 = inlined_call_operand.vmem [shape: bf16[16,32], index: 3, kind: input, shape index: {}]
  %s4 = inlined_call_operand.vmem [shape: f32[1,32], index: 4, kind: input, shape index: {}]
  %s5 = inlined_call_operand.hbm [shape: f32[4,8,16], index: 5, kind: output, shape index: {}]
  %s6 = sld [smem:[#allocation0]]
  $region143: #{tpu_custom_call.1} parent=0
    _
  %s8 = ssub.s32 1, %s6
  %s9 = scalar_select 0, %s8, %s6
  $region1: #{tpu_custom_call.1} parent=0
    #allocation5 [shape = 'u8[16384]{0}', space=vmem, size = 0x4000, scoped, tag = 'input window, operand 0']
    #allocation6 [shape = 'u8[16384]{0}', space=vmem, size = 0x4000, scoped, tag = 'input window, operand 1']
    #allocation7 [shape = 'u8[16384]{0}', space=vmem, size = 0x4000, scoped, tag = 'output window, operand 0']
    #allocation8 [shape = 's32[2]{0}', space=sflag, size = 0x8, scoped, tag = 'scoped memory for tpu_custom_call.1']
    %10 = vsyncpa [#allocation8], 0
    %s11 = scalar_lea.sflag [#allocation8], 1
    %12 = vsyncpa %s11, 0
    loop: start=0, step=1, limit=6
    $region2: #{tpu_custom_call.1} parent=1 // loop_pre_header
      _
    $region3: #{tpu_custom_call.1} parent=1 // loop_header
      %s14 = sphi 0, %s18
      %p15 = scmp.ge.s32.totalorder %s14, 6
      %s21 = sphi 0, %s33
      %s22 = sphi 0, %s29
      %s23 = sphi 0, %s21
      %s24 = sphi 0, %s22
      %s25 = sphi 0, %s23
      %s26 = sphi 0, %s24
      %s38 = sphi 0, %s40
      %s41 = sphi 0, %s38
      %s42 = sphi 0, %s41
      %s58 = sphi 0, %s42
      %s66 = sphi 0, %s68
      %s69 = sphi 0, %s66
      %s70 = sphi 0, %s69
      %s86 = sphi 0, %s70
      %s90 = sphi 0, %s90
      %s92 = sphi 0, %s90
      %s93 = sphi 0, %s92
      %s107 = sphi 0, %s93
      %s111 = sphi 0, %s111
      %s113 = sphi 0, %s111
      %s114 = sphi 0, %s113
      %s128 = sphi 0, %s114
      %s132 = sphi 0, %s132
      %s134 = sphi 0, %s132
      %s135 = sphi 0, %s134
      %s149 = sphi 0, %s135
      %s155 = sphi 0, %s157
      %s158 = sphi 0, %s155
      %s159 = sphi 0, %s158
      %s175 = sphi 0, %s159
    $region4: #{tpu_custom_call.1} parent=1 // loop_header_branch
      %17 = sbr.rel (%p15) target = $region8
    $region5: #{tpu_custom_call.1} parent=1 // loop_body
      %s19 = ssub.s32 %s14, 1
      %s20 = ssub.s32 %s14, 2
      %s27 = sadd.s32 1, %s22
      %p28 = scmp.ge.s32.totalorder %s27, 2
      %s29 = scalar_select %p28, 0, %s27
      %s30 = sadd.s32 1, %s21
      %s31 = scalar_select %p28, %s30, %s21
      %p32 = scmp.ge.s32.totalorder %s31, 2
      %s33 = scalar_select %p32, 0, %s31
      %s34 = ssub.s32 %s21, %s33
      %s35 = ssub.s32 %s22, %s29
      %s36 = sor.u32 %s34, %s35
      %p37 = scmp.eq.s32.totalorder %s36, 0
      %s39 = sadd.s32 %s38, 1
      %s40 = scalar_select %p37, %s38, %s39
      %p43 = pneg %p37
      %p44 = scmp.eq.s32.totalorder %s14, 3
      %p45 = por %p43, %p44
      %p46 = scmp.ne.s32.totalorder %s38, %s41
      %p47 = scmp.eq.s32.totalorder %s14, 0
      %p48 = por %p46, %p47
      %p49 = scmp.ne.s32.totalorder %s38, %s41
      %p50 = scmp.eq.s32.totalorder %s19, 3
      %p51 = por %p49, %p50
      %p52 = scmp.ne.s32.totalorder %s41, %s42
      %p53 = scmp.eq.s32.totalorder %s19, 0
      %p54 = por %p52, %p53
      %p55 = scmp.ne.s32.totalorder %s41, %s42
      %p56 = scmp.eq.s32.totalorder %s20, 3
      %p57 = por %p55, %p56
      %p59 = scmp.ne.s32.totalorder %s42, %s58
      %p60 = scmp.eq.s32.totalorder %s20, 0
      %p61 = por %p59, %p60
      %s62 = ssub.s32 %s21, %s33
      %s63 = ssub.s32 %s22, %s29
      %s64 = sor.u32 %s62, %s63
      %p65 = scmp.eq.s32.totalorder %s64, 0
      %s67 = sadd.s32 %s66, 1
      %s68 = scalar_select %p65, %s66, %s67
      %p71 = pneg %p65
      %p72 = scmp.eq.s32.totalorder %s14, 3
      %p73 = por %p71, %p72
      %p74 = scmp.ne.s32.totalorder %s66, %s69
      %p75 = scmp.eq.s32.totalorder %s14, 0
      %p76 = por %p74, %p75
      %p77 = scmp.ne.s32.totalorder %s66, %s69
      %p78 = scmp.eq.s32.totalorder %s19, 3
      %p79 = por %p77, %p78
      %p80 = scmp.ne.s32.totalorder %s69, %s70
      %p81 = scmp.eq.s32.totalorder %s19, 0
      %p82 = por %p80, %p81
      %p83 = scmp.ne.s32.totalorder %s69, %s70
      %p84 = scmp.eq.s32.totalorder %s20, 3
      %p85 = por %p83, %p84
      %p87 = scmp.ne.s32.totalorder %s70, %s86
      %p88 = scmp.eq.s32.totalorder %s20, 0
      %p89 = por %p87, %p88
      %s91 = sadd.s32 %s90, 1
      %p94 = scmp.eq.s32.totalorder %s14, 3
      %p95 = scmp.ne.s32.totalorder %s90, %s92
      %p96 = scmp.eq.s32.totalorder %s14, 0
      %p97 = por %p95, %p96
      %p98 = scmp.ne.s32.totalorder %s90, %s92
      %p99 = scmp.eq.s32.totalorder %s19, 3
      %p100 = por %p98, %p99
      %p101 = scmp.ne.s32.totalorder %s92, %s93
      %p102 = scmp.eq.s32.totalorder %s19, 0
      %p103 = por %p101, %p102
      %p104 = scmp.ne.s32.totalorder %s92, %s93
      %p105 = scmp.eq.s32.totalorder %s20, 3
      %p106 = por %p104, %p105
      %p108 = scmp.ne.s32.totalorder %s93, %s107
      %p109 = scmp.eq.s32.totalorder %s20, 0
      %p110 = por %p108, %p109
      %s112 = sadd.s32 %s111, 1
      %p115 = scmp.eq.s32.totalorder %s14, 3
      %p116 = scmp.ne.s32.totalorder %s111, %s113
      %p117 = scmp.eq.s32.totalorder %s14, 0
      %p118 = por %p116, %p117
      %p119 = scmp.ne.s32.totalorder %s111, %s113
      %p120 = scmp.eq.s32.totalorder %s19, 3
      %p121 = por %p119, %p120
      %p122 = scmp.ne.s32.totalorder %s113, %s114
      %p123 = scmp.eq.s32.totalorder %s19, 0
      %p124 = por %p122, %p123
      %p125 = scmp.ne.s32.totalorder %s113, %s114
      %p126 = scmp.eq.s32.totalorder %s20, 3
      %p127 = por %p125, %p126
      %p129 = scmp.ne.s32.totalorder %s114, %s128
      %p130 = scmp.eq.s32.totalorder %s20, 0
      %p131 = por %p129, %p130
      %s133 = sadd.s32 %s132, 1
      %p136 = scmp.eq.s32.totalorder %s14, 3
      %p137 = scmp.ne.s32.totalorder %s132, %s134
      %p138 = scmp.eq.s32.totalorder %s14, 0
      %p139 = por %p137, %p138
      %p140 = scmp.ne.s32.totalorder %s132, %s134
      %p141 = scmp.eq.s32.totalorder %s19, 3
      %p142 = por %p140, %p141
      %p143 = scmp.ne.s32.totalorder %s134, %s135
      %p144 = scmp.eq.s32.totalorder %s19, 0
      %p145 = por %p143, %p144
      %p146 = scmp.ne.s32.totalorder %s134, %s135
      %p147 = scmp.eq.s32.totalorder %s20, 3
      %p148 = por %p146, %p147
      %p150 = scmp.ne.s32.totalorder %s135, %s149
      %p151 = scmp.eq.s32.totalorder %s20, 0
      %p152 = por %p150, %p151
      %s153 = ssub.s32 %s21, %s33
      %p154 = scmp.eq.s32.totalorder %s153, 0
      %s156 = sadd.s32 %s155, 1
      %s157 = scalar_select %p154, %s155, %s156
      %p160 = pneg %p154
      %p161 = scmp.eq.s32.totalorder %s14, 3
      %p162 = por %p160, %p161
      %p163 = scmp.ne.s32.totalorder %s155, %s158
      %p164 = scmp.eq.s32.totalorder %s14, 0
      %p165 = por %p163, %p164
      %p166 = scmp.ne.s32.totalorder %s155, %s158
      %p167 = scmp.eq.s32.totalorder %s19, 3
      %p168 = por %p166, %p167
      %p169 = scmp.ne.s32.totalorder %s158, %s159
      %p170 = scmp.eq.s32.totalorder %s19, 0
      %p171 = por %p169, %p170
      %p172 = scmp.ne.s32.totalorder %s158, %s159
      %p173 = scmp.eq.s32.totalorder %s20, 3
      %p174 = por %p172, %p173
      %p176 = scmp.ne.s32.totalorder %s159, %s175
      %p177 = scmp.eq.s32.totalorder %s20, 0
      %p178 = por %p176, %p177
      %p179 = scmp.le.s32.totalorder 1, %s14
      %p180 = scmp.lt.s32.totalorder %s14, 5
      %p181 = pnand %p179, %p180
      %p182 = pneg %p181
      // Predicated region
      $region9: #{tpu_custom_call.1} parent=5 // pred_check
        _
      $region10: #{tpu_custom_call.1} parent=5 // pred_check_branch
        %184 = sbr.rel (%p181) target = $region12
      $region11: #{tpu_custom_call.1} parent=5 // pred_region
        %s185 = ssub.s32 %s14, 1
        // Predicated region
        $region13: #{tpu_custom_call.1} parent=11 // pred_check
          %p186 = pneg %p103
        $region14: #{tpu_custom_call.1} parent=11 // pred_check_branch
          %188 = sbr.rel (%p186) target = $region16
        $region15: #{tpu_custom_call.1} parent=11 // pred_region
          _
        $region16: #{tpu_custom_call.1} parent=11 // pred_fallthru
          _
        // Predicated region
        $region17: #{tpu_custom_call.1} parent=11 // pred_check
          %p189 = pneg %p124
        $region18: #{tpu_custom_call.1} parent=11 // pred_check_branch
          %191 = sbr.rel (%p189) target = $region20
        $region19: #{tpu_custom_call.1} parent=11 // pred_region
          _
        $region20: #{tpu_custom_call.1} parent=11 // pred_fallthru
          _
        // Predicated region
        $region21: #{tpu_custom_call.1} parent=11 // pred_check
          %p192 = pneg %p145
        $region22: #{tpu_custom_call.1} parent=11 // pred_check_branch
          %194 = sbr.rel (%p192) target = $region24
        $region23: #{tpu_custom_call.1} parent=11 // pred_region
          _
        $region24: #{tpu_custom_call.1} parent=11 // pred_fallthru
          _
      $region12: #{tpu_custom_call.1} parent=5 // pred_fallthru
        _
      %p195 = scmp.lt.s32.totalorder %s14, 4
      // Predicated region
      $region25: #{tpu_custom_call.1} parent=5 // pred_check
        %p196 = pneg %p195
      $region26: #{tpu_custom_call.1} parent=5 // pred_check_branch
        %198 = sbr.rel (%p196) target = $region28
      $region27: #{tpu_custom_call.1} parent=5 // pred_region
        // Predicated region
        $region29: #{tpu_custom_call.1} parent=27 // pred_check
          %p199 = pneg %p48
        $region30: #{tpu_custom_call.1} parent=27 // pred_check_branch
          %201 = sbr.rel (%p199) target = $region32
        $region31: #{tpu_custom_call.1} parent=27 // pred_region
          %s202 = sand.u32 %s38, 1
          %s203 = sand.u32 %s38, 1
          %s204 = smul.addr %s203, 16
          %s205 = scalar_lea.vmem [#allocation5], %s204
          %s206 = smul.u32 2, %s21
          %s207 = smul.u32 2, %s22
          %s208 = smul.addr %s206, 4
          %s209 = sadd.s32 %s207, %s208
          %s210 = smul.addr %s209, 4
          %s211 = scalar_lea.vmem %s0, %s210
          // Predicated region
          $region33: #{tpu_custom_call.1} parent=31 // pred_check
            _
          $region34: #{tpu_custom_call.1} parent=31 // pred_check_branch
            %213 = sbr.rel (0) target = $region36
          $region35: #{tpu_custom_call.1} parent=31 // pred_region
            // Predicated region
            $region37: #{tpu_custom_call.1} parent=35 // pred_check
              _
            $region38: #{tpu_custom_call.1} parent=35 // pred_check_branch
              %215 = sbr.rel target = $region40
            $region39: #{tpu_custom_call.1} parent=35 // pred_region
              // Predicated region
              $region52: #{tpu_custom_call.1} parent=39 // pred_check
                _
              $region53: #{tpu_custom_call.1} parent=39 // pred_check_branch
                %237 = sbr.rel (0) target = $region55
              $region54: #{tpu_custom_call.1} parent=39 // pred_region
                loop: start=0, step=1, limit=1
                $region56: #{tpu_custom_call.1} parent=54 // loop_pre_header
                  _
                $region57: #{tpu_custom_call.1} parent=54 // loop_header
                  %s239 = sphi 0, %s243
                  %p240 = scmp.ge.s32.totalorder %s239, 1
                  %s244 = sphi %s211, %s211
                  %s245 = sphi %s205, %s205
                $region58: #{tpu_custom_call.1} parent=54 // loop_header_branch
                  %242 = sbr.rel (%p240) target = $region62
                $region59: #{tpu_custom_call.1} parent=54 // loop_body
                  _
                $region60: #{tpu_custom_call.1} parent=54 // loop_footer
                  %s243 = sadd.s32 1, %s239
                $region61: #{tpu_custom_call.1} parent=54 // loop_footer_branch
                  %238 = sbr.rel target = $region57
                $region62: #{tpu_custom_call.1} parent=54 // loop_exit
                  _
                %s247 = ssub.s32 16, 1
                loop: start=0, step=1, limit=1
                $region63: #{tpu_custom_call.1} parent=54 // loop_pre_header
                  _
                $region64: #{tpu_custom_call.1} parent=54 // loop_header
                  %s249 = sphi 0, %s253
                  %p250 = scmp.ge.s32.totalorder %s249, 1
                  %s254 = sphi %s211, %s211
                  %s255 = sphi %s205, %s205
                $region65: #{tpu_custom_call.1} parent=54 // loop_header_branch
                  %252 = sbr.rel (%p250) target = $region69
                $region66: #{tpu_custom_call.1} parent=54 // loop_body
                  %v256 = vld [vmem:[%s254] sm:%s247]
                  %257 = vst [vmem:[%s255] sm:%s247] %v256
                  %v258 = vld [vmem:[%s254 + $0x4] sm:%s247]
                  %259 = vst [vmem:[%s255 + $0x4] sm:%s247] %v258
                  %v260 = vld [vmem:[%s254 + $0x10] sm:%s247]
                  %261 = vst [vmem:[%s255 + $0x8] sm:%s247] %v260
                  %v262 = vld [vmem:[%s254 + $0x14] sm:%s247]
                  %263 = vst [vmem:[%s255 + $0xc] sm:%s247] %v262
                $region67: #{tpu_custom_call.1} parent=54 // loop_footer
                  %s253 = sadd.s32 1, %s249
                $region68: #{tpu_custom_call.1} parent=54 // loop_footer_branch
                  %248 = sbr.rel target = $region64
                $region69: #{tpu_custom_call.1} parent=54 // loop_exit
                  _
              $region55: #{tpu_custom_call.1} parent=39 // pred_fallthru
                _
            $region40: #{tpu_custom_call.1} parent=35 // pred_fallthru
              _
            // Predicated region
            $region41: #{tpu_custom_call.1} parent=35 // pred_check
              _
            $region42: #{tpu_custom_call.1} parent=35 // pred_check_branch
              %217 = sbr.rel (0) target = $region44
            $region43: #{tpu_custom_call.1} parent=35 // pred_region
              %s219 = ssub.s32 16, 1
              loop: start=0, step=1, limit=1
              $region45: #{tpu_custom_call.1} parent=43 // loop_pre_header
                _
              $region46: #{tpu_custom_call.1} parent=43 // loop_header
                %s221 = sphi 0, %s225
                %p222 = scmp.ge.s32.totalorder %s221, 1
                %s226 = sphi %s211, %s211
                %s227 = sphi %s205, %s205
              $region47: #{tpu_custom_call.1} parent=43 // loop_header_branch
                %224 = sbr.rel (%p222) target = $region51
              $region48: #{tpu_custom_call.1} parent=43 // loop_body
                %v228 = vld [vmem:[%s226] sm:%s219]
                %229 = vst [vmem:[%s227] sm:%s219] %v228
                %v230 = vld [vmem:[%s226 + $0x4] sm:%s219]
                %231 = vst [vmem:[%s227 + $0x4] sm:%s219] %v230
                %v232 = vld [vmem:[%s226 + $0x10] sm:%s219]
                %233 = vst [vmem:[%s227 + $0x8] sm:%s219] %v232
                %v234 = vld [vmem:[%s226 + $0x14] sm:%s219]
                %235 = vst [vmem:[%s227 + $0xc] sm:%s219] %v234
              $region49: #{tpu_custom_call.1} parent=43 // loop_footer
                %s225 = sadd.s32 1, %s221
              $region50: #{tpu_custom_call.1} parent=43 // loop_footer_branch
                %220 = sbr.rel target = $region46
              $region51: #{tpu_custom_call.1} parent=43 // loop_exit
                _
            $region44: #{tpu_custom_call.1} parent=35 // pred_fallthru
              _
          $region36: #{tpu_custom_call.1} parent=31 // pred_fallthru
            _
          %264 = vnop
        $region32: #{tpu_custom_call.1} parent=27 // pred_fallthru
          _
        // Predicated region
        $region70: #{tpu_custom_call.1} parent=27 // pred_check
          %p265 = pneg %p76
        $region71: #{tpu_custom_call.1} parent=27 // pred_check_branch
          %267 = sbr.rel (%p265) target = $region73
        $region72: #{tpu_custom_call.1} parent=27 // pred_region
          %s268 = sand.u32 %s66, 1
          %s269 = sand.u32 %s66, 1
          %s270 = smul.addr %s269, 16
          %s271 = scalar_lea.vmem [#allocation6], %s270
          %s272 = smul.u32 2, %s21
          %s273 = smul.u32 2, %s22
          %s274 = smul.addr %s272, 4
          %s275 = sadd.s32 %s273, %s274
          %s276 = smul.addr %s275, 4
          %s277 = scalar_lea.vmem %s1, %s276
          // Predicated region
          $region74: #{tpu_custom_call.1} parent=72 // pred_check
            _
          $region75: #{tpu_custom_call.1} parent=72 // pred_check_branch
            %279 = sbr.rel (0) target = $region77
          $region76: #{tpu_custom_call.1} parent=72 // pred_region
            // Predicated region
            $region78: #{tpu_custom_call.1} parent=76 // pred_check
              _
            $region79: #{tpu_custom_call.1} parent=76 // pred_check_branch
              %281 = sbr.rel target = $region81
            $region80: #{tpu_custom_call.1} parent=76 // pred_region
              // Predicated region
              $region93: #{tpu_custom_call.1} parent=80 // pred_check
                _
              $region94: #{tpu_custom_call.1} parent=80 // pred_check_branch
                %303 = sbr.rel (0) target = $region96
              $region95: #{tpu_custom_call.1} parent=80 // pred_region
                loop: start=0, step=1, limit=1
                $region97: #{tpu_custom_call.1} parent=95 // loop_pre_header
                  _
                $region98: #{tpu_custom_call.1} parent=95 // loop_header
                  %s305 = sphi 0, %s309
                  %p306 = scmp.ge.s32.totalorder %s305, 1
                  %s310 = sphi %s277, %s277
                  %s311 = sphi %s271, %s271
                $region99: #{tpu_custom_call.1} parent=95 // loop_header_branch
                  %308 = sbr.rel (%p306) target = $region103
                $region100: #{tpu_custom_call.1} parent=95 // loop_body
                  _
                $region101: #{tpu_custom_call.1} parent=95 // loop_footer
                  %s309 = sadd.s32 1, %s305
                $region102: #{tpu_custom_call.1} parent=95 // loop_footer_branch
                  %304 = sbr.rel target = $region98
                $region103: #{tpu_custom_call.1} parent=95 // loop_exit
                  _
                %s313 = ssub.s32 16, 1
                loop: start=0, step=1, limit=1
                $region104: #{tpu_custom_call.1} parent=95 // loop_pre_header
                  _
                $region105: #{tpu_custom_call.1} parent=95 // loop_header
                  %s315 = sphi 0, %s319
                  %p316 = scmp.ge.s32.totalorder %s315, 1
                  %s320 = sphi %s277, %s277
                  %s321 = sphi %s271, %s271
                $region106: #{tpu_custom_call.1} parent=95 // loop_header_branch
                  %318 = sbr.rel (%p316) target = $region110
                $region107: #{tpu_custom_call.1} parent=95 // loop_body
                  %v322 = vld [vmem:[%s320] sm:%s313]
                  %323 = vst [vmem:[%s321] sm:%s313] %v322
                  %v324 = vld [vmem:[%s320 + $0x4] sm:%s313]
                  %325 = vst [vmem:[%s321 + $0x4] sm:%s313] %v324
                  %v326 = vld [vmem:[%s320 + $0x10] sm:%s313]
                  %327 = vst [vmem:[%s321 + $0x8] sm:%s313] %v326
                  %v328 = vld [vmem:[%s320 + $0x14] sm:%s313]
                  %329 = vst [vmem:[%s321 + $0xc] sm:%s313] %v328
                $region108: #{tpu_custom_call.1} parent=95 // loop_footer
                  %s319 = sadd.s32 1, %s315
                $region109: #{tpu_custom_call.1} parent=95 // loop_footer_branch
                  %314 = sbr.rel target = $region105
                $region110: #{tpu_custom_call.1} parent=95 // loop_exit
                  _
              $region96: #{tpu_custom_call.1} parent=80 // pred_fallthru
                _
            $region81: #{tpu_custom_call.1} parent=76 // pred_fallthru
              _
            // Predicated region
            $region82: #{tpu_custom_call.1} parent=76 // pred_check
              _
            $region83: #{tpu_custom_call.1} parent=76 // pred_check_branch
              %283 = sbr.rel (0) target = $region85
            $region84: #{tpu_custom_call.1} parent=76 // pred_region
              %s285 = ssub.s32 16, 1
              loop: start=0, step=1, limit=1
              $region86: #{tpu_custom_call.1} parent=84 // loop_pre_header
                _
              $region87: #{tpu_custom_call.1} parent=84 // loop_header
                %s287 = sphi 0, %s291
                %p288 = scmp.ge.s32.totalorder %s287, 1
                %s292 = sphi %s277, %s277
                %s293 = sphi %s271, %s271
              $region88: #{tpu_custom_call.1} parent=84 // loop_header_branch
                %290 = sbr.rel (%p288) target = $region92
              $region89: #{tpu_custom_call.1} parent=84 // loop_body
                %v294 = vld [vmem:[%s292] sm:%s285]
                %295 = vst [vmem:[%s293] sm:%s285] %v294
                %v296 = vld [vmem:[%s292 + $0x4] sm:%s285]
                %297 = vst [vmem:[%s293 + $0x4] sm:%s285] %v296
                %v298 = vld [vmem:[%s292 + $0x10] sm:%s285]
                %299 = vst [vmem:[%s293 + $0x8] sm:%s285] %v298
                %v300 = vld [vmem:[%s292 + $0x14] sm:%s285]
                %301 = vst [vmem:[%s293 + $0xc] sm:%s285] %v300
              $region90: #{tpu_custom_call.1} parent=84 // loop_footer
                %s291 = sadd.s32 1, %s287
              $region91: #{tpu_custom_call.1} parent=84 // loop_footer_branch
                %286 = sbr.rel target = $region87
              $region92: #{tpu_custom_call.1} parent=84 // loop_exit
                _
            $region85: #{tpu_custom_call.1} parent=76 // pred_fallthru
              _
          $region77: #{tpu_custom_call.1} parent=72 // pred_fallthru
            _
          %330 = vnop
        $region73: #{tpu_custom_call.1} parent=27 // pred_fallthru
          _
      $region28: #{tpu_custom_call.1} parent=5 // pred_fallthru
        _
      %p331 = scmp.le.s32.totalorder 1, %s14
      %p332 = scmp.lt.s32.totalorder %s14, 5
      %p333 = pnand %p331, %p332
      %p334 = pneg %p333
      // Predicated region
      $region111: #{tpu_custom_call.1} parent=5 // pred_check
        _
      $region112: #{tpu_custom_call.1} parent=5 // pred_check_branch
        %336 = sbr.rel (%p333) target = $region114
      $region113: #{tpu_custom_call.1} parent=5 // pred_region
        %s337 = ssub.s32 %s14, 1
        %s338 = sand.u32 %s41, 1
        %s339 = sand.u32 %s41, 1
        %s340 = smul.addr %s339, 16
        %s341 = scalar_lea.vmem [#allocation5], %s340
        // Predicated region
        $region115: #{tpu_custom_call.1} parent=113 // pred_check
          %p342 = pneg %p54
        $region116: #{tpu_custom_call.1} parent=113 // pred_check_branch
          %344 = sbr.rel (%p342) target = $region118
        $region117: #{tpu_custom_call.1} parent=113 // pred_region
          _
        $region118: #{tpu_custom_call.1} parent=113 // pred_fallthru
          _
        %s345 = sand.u32 %s69, 1
        %s346 = sand.u32 %s69, 1
        %s347 = smul.addr %s346, 16
        %s348 = scalar_lea.vmem [#allocation6], %s347
        // Predicated region
        $region119: #{tpu_custom_call.1} parent=113 // pred_check
          %p349 = pneg %p82
        $region120: #{tpu_custom_call.1} parent=113 // pred_check_branch
          %351 = sbr.rel (%p349) target = $region122
        $region121: #{tpu_custom_call.1} parent=113 // pred_region
          _
        $region122: #{tpu_custom_call.1} parent=113 // pred_fallthru
          _
        %s352 = sand.u32 %s41, 1
        %s353 = sand.u32 %s41, 1
        %s354 = smul.addr %s353, 16
        %s355 = scalar_lea.vmem [#allocation5], %s354
        %p356 = pneg %p54
        %p357 = pneg %p51
        %s358 = sand.u32 %s69, 1
        %s359 = sand.u32 %s69, 1
        %s360 = smul.addr %s359, 16
        %s361 = scalar_lea.vmem [#allocation6], %s360
        %p362 = pneg %p82
        %p363 = pneg %p79
        %p364 = pneg %p103
        %p365 = pneg %p100
        %p366 = pneg %p124
        %p367 = pneg %p121
        %p368 = pneg %p145
        %p369 = pneg %p142
        %p370 = pneg %p171
        %p371 = pneg %p168
        %s372 = sand.u32 %s158, 1
        %s373 = scalar_lea.sflag [#allocation8], %s372
        %s374 = sand.u32 %s158, 1
        %s375 = smul.addr %s374, 16
        %s376 = scalar_lea.vmem [#allocation7], %s375
        %s377 = smul.u32 2, %s23
        %s378 = smul.u32 2, %s24
        %s379 = smul.u32 2, %s23
        %s380 = smul.u32 2, %s24
        %s381 = smul.u32 2, %s23
        %p383 = scmp.eq.s32.totalorder %s24, 0
        // Predicated region
        $region123: #{tpu_custom_call.1} parent=113 // pred_check
          %p384 = pneg %p383
        $region124: #{tpu_custom_call.1} parent=113 // pred_check_branch
          %386 = sbr.rel (%p384) target = $region126
        $region125: #{tpu_custom_call.1} parent=113 // pred_region
          %vm387 = vcmask 7168
          %388 = vst.msk [vmem:[#allocation2] sm:$0xff] %vm387, -inf
          %389 = vst.msk [vmem:[#allocation2 + $0x8] sm:$0xff] %vm387, -inf
          %390 = vst.msk [vmem:[#allocation3] sm:$0xff] %vm387, 0.0
          %391 = vst.msk [vmem:[#allocation3 + $0x8] sm:$0xff] %vm387, 0.0
          %vm392 = vcmask 130048
          %393 = vst.msk [vmem:[#allocation4] sm:$0xff] %vm392, 0.0
          %394 = vst.msk [vmem:[#allocation4 + $0x8] sm:$0xff] %vm392, 0.0
        $region126: #{tpu_custom_call.1} parent=113 // pred_fallthru
          _
        %v395 = vld [vmem:[%s341] sm:$0xf]
        %v396 = vld [vmem:[%s341 + $0x4] sm:$0xf]
        %v397 = vld [vmem:[%s341 + $0x8] sm:$0xf]
        %v398 = vld [vmem:[%s341 + $0xc] sm:$0xf]
        %v399 = vld [vmem:[%s3] sm:$0xf]
        %v400 = vld [vmem:[%s3 + $0x4] sm:$0xf]
        %v405 = vunpack.c.l.b16 %v395
        %v406 = vunpack.c.l.b16 %v396
        %v407 = vunpack.c.l.b16 %v397
        %v408 = vunpack.c.l.b16 %v398
        %v409 = vpack.c.b16 %v406, %v405
        %v410 = vpack.c.b16 %v408, %v407
        %v413 = vunpack.c.l.b16 %v399
        %v414 = vunpack.c.l.b16 %v400
        %v415 = vpack.c.b16 %v414, %v413
        %vm417 = vcmask 130048
        %v419 = vsel %vm417, %v409, 0
        %v422 = vsel %vm417, %v410, 0
        %424 = vmatprep.subr.bf16.mxu0 0
        %425 = vmatpush1.bf16.msra.mxu0 0
        %426 = vmatprep.subr.bf16.mxu0 0
        %427 = vmatpush1.bf16.msra.mxu0 0
        %428 = vmatprep.subr.bf16.mxu0 0
        %429 = vmatpush1.bf16.msra.mxu0 0
        %430 = vmatprep.subr.bf16.mxu0 0
        %431 = vmatpush1.bf16.msra.mxu0 0
        %432 = vmatprep.subr.bf16.mxu0 0
        %433 = vmatpush1.bf16.msra.mxu0 0
        %434 = vmatprep.subr.bf16.mxu0 0
        %435 = vmatpush1.bf16.msra.mxu0 0
        %436 = vmatprep.subr.bf16.mxu0 0
        %437 = vmatpush1.bf16.msra.mxu0 0
        %438 = vmatprep.subr.bf16.mxu0 0
        %439 = vmatpush1.bf16.msra.mxu0 %v415
        %440 = vmatprep.subr.bf16.mxu0 0
        %441 = vmatpush2.bf16.msra.mxu0 0
        %442 = vmatprep.subr.bf16.mxu0 0
        %443 = vmatpush2.bf16.msra.mxu0 0
        %444 = vmatprep.subr.bf16.mxu0 0
        %445 = vmatpush2.bf16.msra.mxu0 0
        %446 = vmatprep.subr.bf16.mxu0 0
        %447 = vmatpush2.bf16.msra.mxu0 0
        %448 = vmatprep.subr.bf16.mxu0 0
        %449 = vmatpush2.bf16.msra.mxu0 0
        %450 = vmatprep.subr.bf16.mxu0 0
        %451 = vmatpush2.bf16.msra.mxu0 0
        %452 = vmatprep.subr.bf16.mxu0 0
        %453 = vmatpush2.bf16.msra.mxu0 0
        %454 = vmatprep.subr.bf16.mxu0 0
        %455 = vmatpush2.bf16.msra.mxu0 0
        %456 = vmatprep.mubr.bf16.mxu0 0
        %457 = vmatmul.mubr.bf16.gmra.mxu0 %v419
        %v458 = vpop.f32.mrf.mxu0
        %v459 = vadd.f32 0.0, %v458
        %v460 = vpop.f32.mrf.mxu0
        %v461 = vpop.f32.mrf.mxu0
        %v462 = vadd.f32 0.0, %v461
        %v463 = vpop.f32.mrf.mxu0
        %464 = vmatprep.mubr.bf16.mxu0 0
        %465 = vmatmul.mubr.bf16.gmra.mxu0 %v422
        %v466 = vpop.f32.mrf.mxu0
        %v467 = vadd.f32 0.0, %v466
        %v468 = vpop.f32.mrf.mxu0
        %v469 = vpop.f32.mrf.mxu0
        %v470 = vadd.f32 0.0, %v469
        %v471 = vpop.f32.mrf.mxu0
        %472 = vdwg.mxu0
        %v473 = vld [vmem:[%s2] sm:$0xff]
        %v475 = vcombine.high %v473, %v473
        %v477 = vunpack.c.l.s4 1966171168
        %v478 = vunpack.c.0.s8 %v477
        %v479 = vlaneseq
        %v480 = vshrl.u32 %v479, 7
        %v481 = vsub.s32 %v478, %v480
        %v482 = vrot.slane %v473, %v481
        %v484 = vunpack.c.l.s4 1966171168
        %v485 = vunpack.c.0.s8 %v484
        %v486 = vlaneseq
        %v487 = vshrl.u32 %v486, 7
        %v488 = vsub.s32 %v485, %v487
        %v489 = vrot.slane %v475, %v488
        %v490 = vcombine.high %v482, %v482
        %v491 = vcombine.high %v489, %v489
        %v493 = vunpack.c.l.s4 1966171168
        %v494 = vunpack.c.0.s8 %v493
        %v495 = vlaneseq
        %v496 = vshrl.u32 %v495, 7
        %v497 = vsub.s32 %v494, %v496
        %v498 = vrot.slane %v482, %v497
        %v500 = vunpack.c.l.s4 1966171168
        %v501 = vunpack.c.0.s8 %v500
        %v502 = vlaneseq
        %v503 = vshrl.u32 %v502, 7
        %v504 = vsub.s32 %v501, %v503
        %v505 = vrot.slane %v489, %v504
        %v507 = vunpack.c.l.s4 1966171168
        %v508 = vunpack.c.0.s8 %v507
        %v509 = vlaneseq
        %v510 = vshrl.u32 %v509, 7
        %v511 = vsub.s32 %v508, %v510
        %v512 = vrot.slane %v490, %v511
        %v514 = vunpack.c.l.s4 1966171168
        %v515 = vunpack.c.0.s8 %v514
        %v516 = vlaneseq
        %v517 = vshrl.u32 %v516, 7
        %v518 = vsub.s32 %v515, %v517
        %v519 = vrot.slane %v491, %v518
        %v520 = vcombine.high %v498, %v498
        %v521 = vcombine.high %v505, %v505
        %v522 = vcombine.high %v512, %v512
        %v523 = vcombine.high %v519, %v519
        %v524 = vlaneseq
        %v525 = vshrl.u32 %v524, 7
        %v526 = vsub.s32 0, %v525
        %v527 = vrot.slane %v498, %v526
        %v528 = vlaneseq
        %v529 = vshrl.u32 %v528, 7
        %v530 = vsub.s32 0, %v529
        %v531 = vrot.slane %v512, %v530
        %v532 = vlaneseq
        %v533 = vshrl.u32 %v532, 7
        %v534 = vsub.s32 0, %v533
        %v535 = vrot.slane %v520, %v534
        %v536 = vlaneseq
        %v537 = vshrl.u32 %v536, 7
        %v538 = vsub.s32 0, %v537
        %v539 = vrot.slane %v522, %v538
        %v540 = vlaneseq
        %v541 = vshrl.u32 %v540, 7
        %v542 = vsub.s32 0, %v541
        %v543 = vrot.slane %v505, %v542
        %v544 = vlaneseq
        %v545 = vshrl.u32 %v544, 7
        %v546 = vsub.s32 0, %v545
        %v547 = vrot.slane %v519, %v546
        %v548 = vlaneseq
        %v549 = vshrl.u32 %v548, 7
        %v550 = vsub.s32 0, %v549
        %v551 = vrot.slane %v521, %v550
        %v552 = vlaneseq
        %v553 = vshrl.u32 %v552, 7
        %v554 = vsub.s32 0, %v553
        %v555 = vrot.slane %v523, %v554
        %v564 = vadd.f32 %v459, %v527
        %v565 = vadd.f32 %v462, %v527
        %v566 = vadd.f32 %v459, %v531
        %v567 = vadd.f32 %v462, %v531
        %v568 = vadd.f32 %v459, %v535
        %v569 = vadd.f32 %v462, %v535
        %v570 = vadd.f32 %v459, %v539
        %v571 = vadd.f32 %v462, %v539
        %v572 = vadd.f32 %v459, %v543
        %v573 = vadd.f32 %v462, %v543
        %v574 = vadd.f32 %v459, %v547
        %v575 = vadd.f32 %v462, %v547
        %v576 = vadd.f32 %v459, %v551
        %v577 = vadd.f32 %v462, %v551
        %v578 = vadd.f32 %v459, %v555
        %v579 = vadd.f32 %v462, %v555
        %v580 = vadd.f32 %v467, %v527
        %v581 = vadd.f32 %v470, %v527
        %v582 = vadd.f32 %v467, %v531
        %v583 = vadd.f32 %v470, %v531
        %v584 = vadd.f32 %v467, %v535
        %v585 = vadd.f32 %v470, %v535
        %v586 = vadd.f32 %v467, %v539
        %v587 = vadd.f32 %v470, %v539
        %v588 = vadd.f32 %v467, %v543
        %v589 = vadd.f32 %v470, %v543
        %v590 = vadd.f32 %v467, %v547
        %v591 = vadd.f32 %v470, %v547
        %v592 = vadd.f32 %v467, %v551
        %v593 = vadd.f32 %v470, %v551
        %v594 = vadd.f32 %v467, %v555
        %v595 = vadd.f32 %v470, %v555
        %v596 = vmax.f32 %v564, 0.0
        %v597 = vmax.f32 %v565, 0.0
        %v598 = vmax.f32 %v566, 0.0
        %v599 = vmax.f32 %v567, 0.0
        %v600 = vmax.f32 %v568, 0.0
        %v601 = vmax.f32 %v569, 0.0
        %v602 = vmax.f32 %v570, 0.0
        %v603 = vmax.f32 %v571, 0.0
        %v604 = vmax.f32 %v572, 0.0
        %v605 = vmax.f32 %v573, 0.0
        %v606 = vmax.f32 %v574, 0.0
        %v607 = vmax.f32 %v575, 0.0
        %v608 = vmax.f32 %v576, 0.0
        %v609 = vmax.f32 %v577, 0.0
        %v610 = vmax.f32 %v578, 0.0
        %v611 = vmax.f32 %v579, 0.0
        %v612 = vmax.f32 %v580, 0.0
        %v613 = vmax.f32 %v581, 0.0
        %v614 = vmax.f32 %v582, 0.0
        %v615 = vmax.f32 %v583, 0.0
        %v616 = vmax.f32 %v584, 0.0
        %v617 = vmax.f32 %v585, 0.0
        %v618 = vmax.f32 %v586, 0.0
        %v619 = vmax.f32 %v587, 0.0
        %v620 = vmax.f32 %v588, 0.0
        %v621 = vmax.f32 %v589, 0.0
        %v622 = vmax.f32 %v590, 0.0
        %v623 = vmax.f32 %v591, 0.0
        %v624 = vmax.f32 %v592, 0.0
        %v625 = vmax.f32 %v593, 0.0
        %v626 = vmax.f32 %v594, 0.0
        %v627 = vmax.f32 %v595, 0.0
        %v628 = vld [vmem:[%s4] sm:$0x1]
        %v630 = vlaneseq
        %v631 = vshrl.u32 %v630, 7
        %v632 = vsub.s32 0, %v631
        %v633 = vrot.slane %v628, %v632
        %v635 = vmul.f32 %v596, %v633
        %v636 = vmul.f32 %v597, %v633
        %v637 = vmul.f32 %v598, %v633
        %v638 = vmul.f32 %v599, %v633
        %v639 = vmul.f32 %v600, %v633
        %v640 = vmul.f32 %v601, %v633
        %v641 = vmul.f32 %v602, %v633
        %v642 = vmul.f32 %v603, %v633
        %v643 = vmul.f32 %v604, %v633
        %v644 = vmul.f32 %v605, %v633
        %v645 = vmul.f32 %v606, %v633
        %v646 = vmul.f32 %v607, %v633
        %v647 = vmul.f32 %v608, %v633
        %v648 = vmul.f32 %v609, %v633
        %v649 = vmul.f32 %v610, %v633
        %v650 = vmul.f32 %v611, %v633
        %v651 = vmul.f32 %v612, %v633
        %v652 = vmul.f32 %v613, %v633
        %v653 = vmul.f32 %v614, %v633
        %v654 = vmul.f32 %v615, %v633
        %v655 = vmul.f32 %v616, %v633
        %v656 = vmul.f32 %v617, %v633
        %v657 = vmul.f32 %v618, %v633
        %v658 = vmul.f32 %v619, %v633
        %v659 = vmul.f32 %v620, %v633
        %v660 = vmul.f32 %v621, %v633
        %v661 = vmul.f32 %v622, %v633
        %v662 = vmul.f32 %v623, %v633
        %v663 = vmul.f32 %v624, %v633
        %v664 = vmul.f32 %v625, %v633
        %v665 = vmul.f32 %v626, %v633
        %v666 = vmul.f32 %v627, %v633
        %vm667 = vcmask 261120
        %v668 = vsel %vm667, %v635, 0.0
        %669 = vadd.xlane.f32.xlu0 %v668
        %v670 = vpop.xlane.xlu0 %669
        %v671 = vsel %vm667, %v636, 0.0
        %672 = vadd.xlane.f32.xlu0 %v671
        %v673 = vpop.xlane.xlu0 %672
        %v674 = vsel %vm667, %v637, 0.0
        %675 = vadd.xlane.f32.xlu0 %v674
        %v676 = vpop.xlane.xlu0 %675
        %v677 = vsel %vm667, %v638, 0.0
        %678 = vadd.xlane.f32.xlu0 %v677
        %v679 = vpop.xlane.xlu0 %678
        %v680 = vsel %vm667, %v639, 0.0
        %681 = vadd.xlane.f32.xlu0 %v680
        %v682 = vpop.xlane.xlu0 %681
        %v683 = vsel %vm667, %v640, 0.0
        %684 = vadd.xlane.f32.xlu0 %v683
        %v685 = vpop.xlane.xlu0 %684
        %v686 = vsel %vm667, %v641, 0.0
        %687 = vadd.xlane.f32.xlu0 %v686
        %v688 = vpop.xlane.xlu0 %687
        %v689 = vsel %vm667, %v642, 0.0
        %690 = vadd.xlane.f32.xlu0 %v689
        %v691 = vpop.xlane.xlu0 %690
        %v692 = vsel %vm667, %v643, 0.0
        %693 = vadd.xlane.f32.xlu0 %v692
        %v694 = vpop.xlane.xlu0 %693
        %v695 = vsel %vm667, %v644, 0.0
        %696 = vadd.xlane.f32.xlu0 %v695
        %v697 = vpop.xlane.xlu0 %696
        %v698 = vsel %vm667, %v645, 0.0
        %699 = vadd.xlane.f32.xlu0 %v698
        %v700 = vpop.xlane.xlu0 %699
        %v701 = vsel %vm667, %v646, 0.0
        %702 = vadd.xlane.f32.xlu0 %v701
        %v703 = vpop.xlane.xlu0 %702
        %v704 = vsel %vm667, %v647, 0.0
        %705 = vadd.xlane.f32.xlu0 %v704
        %v706 = vpop.xlane.xlu0 %705
        %v707 = vsel %vm667, %v648, 0.0
        %708 = vadd.xlane.f32.xlu0 %v707
        %v709 = vpop.xlane.xlu0 %708
        %v710 = vsel %vm667, %v649, 0.0
        %711 = vadd.xlane.f32.xlu0 %v710
        %v712 = vpop.xlane.xlu0 %711
        %v713 = vsel %vm667, %v650, 0.0
        %714 = vadd.xlane.f32.xlu0 %v713
        %v715 = vpop.xlane.xlu0 %714
        %v716 = vsel %vm667, %v651, 0.0
        %717 = vadd.xlane.f32.xlu0 %v716
        %v718 = vpop.xlane.xlu0 %717
        %v719 = vsel %vm667, %v652, 0.0
        %720 = vadd.xlane.f32.xlu0 %v719
        %v721 = vpop.xlane.xlu0 %720
        %v722 = vsel %vm667, %v653, 0.0
        %723 = vadd.xlane.f32.xlu0 %v722
        %v724 = vpop.xlane.xlu0 %723
        %v725 = vsel %vm667, %v654, 0.0
        %726 = vadd.xlane.f32.xlu0 %v725
        %v727 = vpop.xlane.xlu0 %726
        %v728 = vsel %vm667, %v655, 0.0
        %729 = vadd.xlane.f32.xlu0 %v728
        %v730 = vpop.xlane.xlu0 %729
        %v731 = vsel %vm667, %v656, 0.0
        %732 = vadd.xlane.f32.xlu0 %v731
        %v733 = vpop.xlane.xlu0 %732
        %v734 = vsel %vm667, %v657, 0.0
        %735 = vadd.xlane.f32.xlu0 %v734
        %v736 = vpop.xlane.xlu0 %735
        %v737 = vsel %vm667, %v658, 0.0
        %738 = vadd.xlane.f32.xlu0 %v737
        %v739 = vpop.xlane.xlu0 %738
        %v740 = vsel %vm667, %v659, 0.0
        %741 = vadd.xlane.f32.xlu0 %v740
        %v742 = vpop.xlane.xlu0 %741
        %v743 = vsel %vm667, %v660, 0.0
        %744 = vadd.xlane.f32.xlu0 %v743
        %v745 = vpop.xlane.xlu0 %744
        %v746 = vsel %vm667, %v661, 0.0
        %747 = vadd.xlane.f32.xlu0 %v746
        %v748 = vpop.xlane.xlu0 %747
        %v749 = vsel %vm667, %v662, 0.0
        %750 = vadd.xlane.f32.xlu0 %v749
        %v751 = vpop.xlane.xlu0 %750
        %v752 = vsel %vm667, %v663, 0.0
        %753 = vadd.xlane.f32.xlu0 %v752
        %v754 = vpop.xlane.xlu0 %753
        %v755 = vsel %vm667, %v664, 0.0
        %756 = vadd.xlane.f32.xlu0 %v755
        %v757 = vpop.xlane.xlu0 %756
        %v758 = vsel %vm667, %v665, 0.0
        %759 = vadd.xlane.f32.xlu0 %v758
        %v760 = vpop.xlane.xlu0 %759
        %v761 = vsel %vm667, %v666, 0.0
        %762 = vadd.xlane.f32.xlu0 %v761
        %v763 = vpop.xlane.xlu0 %762
        %v764 = vld [vmem:[#allocation2] sm:$0xff]
        %v765 = vld [vmem:[#allocation2 + $0x8] sm:$0xff]
        %v798 = vlaneseq
        %v799 = vand.u32 %v798, 127
        %v800 = vlaneseq
        %v801 = vshrl.u32 %v800, 7
        %v802 = vsub.s32 %v799, %v801
        %v803 = vrot.slane %v670, %v802
        %v804 = vadd.s32 %v799, 4294967288
        %v805 = vlaneseq
        %v806 = vshrl.u32 %v805, 7
        %v807 = vsub.s32 %v804, %v806
        %v808 = vrot.slane %v673, %v807
        %vm809 = vcmask 130112
        %v810 = vsel %vm809, %v808, %v803
        %v811 = vlaneseq
        %v812 = vshrl.u32 %v811, 7
        %v813 = vsub.s32 %v799, %v812
        %v814 = vrot.slane %v676, %v813
        %v815 = vlaneseq
        %v816 = vshrl.u32 %v815, 7
        %v817 = vsub.s32 %v804, %v816
        %v818 = vrot.slane %v679, %v817
        %v819 = vsel %vm809, %v818, %v814
        %v820 = vlaneseq
        %v821 = vshrl.u32 %v820, 7
        %v822 = vsub.s32 %v799, %v821
        %v823 = vrot.slane %v682, %v822
        %v824 = vlaneseq
        %v825 = vshrl.u32 %v824, 7
        %v826 = vsub.s32 %v804, %v825
        %v827 = vrot.slane %v685, %v826
        %v828 = vsel %vm809, %v827, %v823
        %v829 = vlaneseq
        %v830 = vshrl.u32 %v829, 7
        %v831 = vsub.s32 %v799, %v830
        %v832 = vrot.slane %v688, %v831
        %v833 = vlaneseq
        %v834 = vshrl.u32 %v833, 7
        %v835 = vsub.s32 %v804, %v834
        %v836 = vrot.slane %v691, %v835
        %v837 = vsel %vm809, %v836, %v832
        %v838 = vlaneseq
        %v839 = vshrl.u32 %v838, 7
        %v840 = vsub.s32 %v799, %v839
        %v841 = vrot.slane %v694, %v840
        %v842 = vlaneseq
        %v843 = vshrl.u32 %v842, 7
        %v844 = vsub.s32 %v804, %v843
        %v845 = vrot.slane %v697, %v844
        %v846 = vsel %vm809, %v845, %v841
        %v847 = vlaneseq
        %v848 = vshrl.u32 %v847, 7
        %v849 = vsub.s32 %v799, %v848
        %v850 = vrot.slane %v700, %v849
        %v851 = vlaneseq
        %v852 = vshrl.u32 %v851, 7
        %v853 = vsub.s32 %v804, %v852
        %v854 = vrot.slane %v703, %v853
        %v855 = vsel %vm809, %v854, %v850
        %v856 = vlaneseq
        %v857 = vshrl.u32 %v856, 7
        %v858 = vsub.s32 %v799, %v857
        %v859 = vrot.slane %v706, %v858
        %v860 = vlaneseq
        %v861 = vshrl.u32 %v860, 7
        %v862 = vsub.s32 %v804, %v861
        %v863 = vrot.slane %v709, %v862
        %v864 = vsel %vm809, %v863, %v859
        %v865 = vlaneseq
        %v866 = vshrl.u32 %v865, 7
        %v867 = vsub.s32 %v799, %v866
        %v868 = vrot.slane %v712, %v867
        %v869 = vlaneseq
        %v870 = vshrl.u32 %v869, 7
        %v871 = vsub.s32 %v804, %v870
        %v872 = vrot.slane %v715, %v871
        %v873 = vsel %vm809, %v872, %v868
        %v874 = vlaneseq
        %v875 = vshrl.u32 %v874, 7
        %v876 = vsub.s32 %v799, %v875
        %v877 = vrot.slane %v718, %v876
        %v878 = vlaneseq
        %v879 = vshrl.u32 %v878, 7
        %v880 = vsub.s32 %v804, %v879
        %v881 = vrot.slane %v721, %v880
        %v882 = vsel %vm809, %v881, %v877
        %v883 = vlaneseq
        %v884 = vshrl.u32 %v883, 7
        %v885 = vsub.s32 %v799, %v884
        %v886 = vrot.slane %v724, %v885
        %v887 = vlaneseq
        %v888 = vshrl.u32 %v887, 7
        %v889 = vsub.s32 %v804, %v888
        %v890 = vrot.slane %v727, %v889
        %v891 = vsel %vm809, %v890, %v886
        %v892 = vlaneseq
        %v893 = vshrl.u32 %v892, 7
        %v894 = vsub.s32 %v799, %v893
        %v895 = vrot.slane %v730, %v894
        %v896 = vlaneseq
        %v897 = vshrl.u32 %v896, 7
        %v898 = vsub.s32 %v804, %v897
        %v899 = vrot.slane %v733, %v898
        %v900 = vsel %vm809, %v899, %v895
        %v901 = vlaneseq
        %v902 = vshrl.u32 %v901, 7
        %v903 = vsub.s32 %v799, %v902
        %v904 = vrot.slane %v736, %v903
        %v905 = vlaneseq
        %v906 = vshrl.u32 %v905, 7
        %v907 = vsub.s32 %v804, %v906
        %v908 = vrot.slane %v739, %v907
        %v909 = vsel %vm809, %v908, %v904
        %v910 = vlaneseq
        %v911 = vshrl.u32 %v910, 7
        %v912 = vsub.s32 %v799, %v911
        %v913 = vrot.slane %v742, %v912
        %v914 = vlaneseq
        %v915 = vshrl.u32 %v914, 7
        %v916 = vsub.s32 %v804, %v915
        %v917 = vrot.slane %v745, %v916
        %v918 = vsel %vm809, %v917, %v913
        %v919 = vlaneseq
        %v920 = vshrl.u32 %v919, 7
        %v921 = vsub.s32 %v799, %v920
        %v922 = vrot.slane %v748, %v921
        %v923 = vlaneseq
        %v924 = vshrl.u32 %v923, 7
        %v925 = vsub.s32 %v804, %v924
        %v926 = vrot.slane %v751, %v925
        %v927 = vsel %vm809, %v926, %v922
        %v928 = vlaneseq
        %v929 = vshrl.u32 %v928, 7
        %v930 = vsub.s32 %v799, %v929
        %v931 = vrot.slane %v754, %v930
        %v932 = vlaneseq
        %v933 = vshrl.u32 %v932, 7
        %v934 = vsub.s32 %v804, %v933
        %v935 = vrot.slane %v757, %v934
        %v936 = vsel %vm809, %v935, %v931
        %v937 = vlaneseq
        %v938 = vshrl.u32 %v937, 7
        %v939 = vsub.s32 %v799, %v938
        %v940 = vrot.slane %v760, %v939
        %v941 = vlaneseq
        %v942 = vshrl.u32 %v941, 7
        %v943 = vsub.s32 %v804, %v942
        %v944 = vrot.slane %v763, %v943
        %v945 = vsel %vm809, %v944, %v940
        %vm946 = vcmask 1041409
        %v947 = vsel %vm946, %v819, %v810
        %vm948 = vcmask 1042434
        %v949 = vsel %vm948, %v828, %v947
        %vm950 = vcmask 1043459
        %v951 = vsel %vm950, %v837, %v949
        %vm952 = vcmask 1044484
        %v953 = vsel %vm952, %v846, %v951
        %vm954 = vcmask 1045509
        %v955 = vsel %vm954, %v855, %v953
        %vm956 = vcmask 1046534
        %v957 = vsel %vm956, %v864, %v955
        %vm958 = vcmask 1047559
        %v959 = vsel %vm958, %v873, %v957
        %v960 = vsel %vm946, %v891, %v882
        %v961 = vsel %vm948, %v900, %v960
        %v962 = vsel %vm950, %v909, %v961
        %v963 = vsel %vm952, %v918, %v962
        %v964 = vsel %vm954, %v927, %v963
        %v965 = vsel %vm956, %v936, %v964
        %v966 = vsel %vm958, %v945, %v965
        %v969 = vsel %vm417, %v959, -inf
        %970 = vmax.xlane.f32.xlu0 %v969
        %v971 = vpop.xlane.xlu0 %970
        %v972 = vsel %vm417, %v966, -inf
        %973 = vmax.xlane.f32.xlu0 %v972
        %v974 = vpop.xlane.xlu0 %973
        %v975 = vmax.f32 %v764, %v971
        %v976 = vmax.f32 %v765, %v974
        %v977 = vsub.f32 %v764, %v975
        %v978 = vsub.f32 %v765, %v976
        %v979 = vmul.f32 %v977, 1.442695
        %v980 = vpow.pop %v979
        %v981 = vmul.f32 %v978, 1.442695
        %v982 = vpow.pop %v981
        %984 = vset.pattern.permute.xlu0 0
        %985 = vperm.xlu0 %984, %v975
        %v986 = vpop.permute.xlu0 %985
        %988 = vset.pattern.permute.xlu0 0
        %989 = vperm.xlu0 %988, %v976
        %v990 = vpop.permute.xlu0 %989
        %v991 = vlaneseq
        %v992 = vshrl.u32 %v991, 7
        %v993 = vsub.s32 0, %v992
        %v994 = vrot.slane %v986, %v993
        %v995 = vlaneseq
        %v996 = vshrl.u32 %v995, 7
        %v997 = vsub.s32 1, %v996
        %v998 = vrot.slane %v986, %v997
        %v999 = vlaneseq
        %v1000 = vshrl.u32 %v999, 7
        %v1001 = vsub.s32 2, %v1000
        %v1002 = vrot.slane %v986, %v1001
        %v1003 = vlaneseq
        %v1004 = vshrl.u32 %v1003, 7
        %v1005 = vsub.s32 3, %v1004
        %v1006 = vrot.slane %v986, %v1005
        %v1007 = vlaneseq
        %v1008 = vshrl.u32 %v1007, 7
        %v1009 = vsub.s32 4, %v1008
        %v1010 = vrot.slane %v986, %v1009
        %v1011 = vlaneseq
        %v1012 = vshrl.u32 %v1011, 7
        %v1013 = vsub.s32 5, %v1012
        %v1014 = vrot.slane %v986, %v1013
        %v1015 = vlaneseq
        %v1016 = vshrl.u32 %v1015, 7
        %v1017 = vsub.s32 6, %v1016
        %v1018 = vrot.slane %v986, %v1017
        %v1019 = vlaneseq
        %v1020 = vshrl.u32 %v1019, 7
        %v1021 = vsub.s32 7, %v1020
        %v1022 = vrot.slane %v986, %v1021
        %v1023 = vlaneseq
        %v1024 = vshrl.u32 %v1023, 7
        %v1025 = vsub.s32 0, %v1024
        %v1026 = vrot.slane %v990, %v1025
        %v1027 = vlaneseq
        %v1028 = vshrl.u32 %v1027, 7
        %v1029 = vsub.s32 1, %v1028
        %v1030 = vrot.slane %v990, %v1029
        %v1031 = vlaneseq
        %v1032 = vshrl.u32 %v1031, 7
        %v1033 = vsub.s32 2, %v1032
        %v1034 = vrot.slane %v990, %v1033
        %v1035 = vlaneseq
        %v1036 = vshrl.u32 %v1035, 7
        %v1037 = vsub.s32 3, %v1036
        %v1038 = vrot.slane %v990, %v1037
        %v1039 = vlaneseq
        %v1040 = vshrl.u32 %v1039, 7
        %v1041 = vsub.s32 4, %v1040
        %v1042 = vrot.slane %v990, %v1041
        %v1043 = vlaneseq
        %v1044 = vshrl.u32 %v1043, 7
        %v1045 = vsub.s32 5, %v1044
        %v1046 = vrot.slane %v990, %v1045
        %v1047 = vlaneseq
        %v1048 = vshrl.u32 %v1047, 7
        %v1049 = vsub.s32 6, %v1048
        %v1050 = vrot.slane %v990, %v1049
        %v1051 = vlaneseq
        %v1052 = vshrl.u32 %v1051, 7
        %v1053 = vsub.s32 7, %v1052
        %v1054 = vrot.slane %v990, %v1053
        %v1071 = vsub.f32 %v670, %v994
        %v1072 = vsub.f32 %v673, %v994
        %v1073 = vsub.f32 %v676, %v998
        %v1074 = vsub.f32 %v679, %v998
        %v1075 = vsub.f32 %v682, %v1002
        %v1076 = vsub.f32 %v685, %v1002
        %v1077 = vsub.f32 %v688, %v1006
        %v1078 = vsub.f32 %v691, %v1006
        %v1079 = vsub.f32 %v694, %v1010
        %v1080 = vsub.f32 %v697, %v1010
        %v1081 = vsub.f32 %v700, %v1014
        %v1082 = vsub.f32 %v703, %v1014
        %v1083 = vsub.f32 %v706, %v1018
        %v1084 = vsub.f32 %v709, %v1018
        %v1085 = vsub.f32 %v712, %v1022
        %v1086 = vsub.f32 %v715, %v1022
        %v1087 = vsub.f32 %v718, %v1026
        %v1088 = vsub.f32 %v721, %v1026
        %v1089 = vsub.f32 %v724, %v1030
        %v1090 = vsub.f32 %v727, %v1030
        %v1091 = vsub.f32 %v730, %v1034
        %v1092 = vsub.f32 %v733, %v1034
        %v1093 = vsub.f32 %v736, %v1038
        %v1094 = vsub.f32 %v739, %v1038
        %v1095 = vsub.f32 %v742, %v1042
        %v1096 = vsub.f32 %v745, %v1042
        %v1097 = vsub.f32 %v748, %v1046
        %v1098 = vsub.f32 %v751, %v1046
        %v1099 = vsub.f32 %v754, %v1050
        %v1100 = vsub.f32 %v757, %v1050
        %v1101 = vsub.f32 %v760, %v1054
        %v1102 = vsub.f32 %v763, %v1054
        %v1103 = vmul.f32 %v1071, 1.442695
        %v1104 = vpow.pop %v1103
        %v1105 = vmul.f32 %v1072, 1.442695
        %v1106 = vpow.pop %v1105
        %v1107 = vmul.f32 %v1073, 1.442695
        %v1108 = vpow.pop %v1107
        %v1109 = vmul.f32 %v1074, 1.442695
        %v1110 = vpow.pop %v1109
        %v1111 = vmul.f32 %v1075, 1.442695
        %v1112 = vpow.pop %v1111
        %v1113 = vmul.f32 %v1076, 1.442695
        %v1114 = vpow.pop %v1113
        %v1115 = vmul.f32 %v1077, 1.442695
        %v1116 = vpow.pop %v1115
        %v1117 = vmul.f32 %v1078, 1.442695
        %v1118 = vpow.pop %v1117
        %v1119 = vmul.f32 %v1079, 1.442695
        %v1120 = vpow.pop %v1119
        %v1121 = vmul.f32 %v1080, 1.442695
        %v1122 = vpow.pop %v1121
        %v1123 = vmul.f32 %v1081, 1.442695
        %v1124 = vpow.pop %v1123
        %v1125 = vmul.f32 %v1082, 1.442695
        %v1126 = vpow.pop %v1125
        %v1127 = vmul.f32 %v1083, 1.442695
        %v1128 = vpow.pop %v1127
        %v1129 = vmul.f32 %v1084, 1.442695
        %v1130 = vpow.pop %v1129
        %v1131 = vmul.f32 %v1085, 1.442695
        %v1132 = vpow.pop %v1131
        %v1133 = vmul.f32 %v1086, 1.442695
        %v1134 = vpow.pop %v1133
        %v1135 = vmul.f32 %v1087, 1.442695
        %v1136 = vpow.pop %v1135
        %v1137 = vmul.f32 %v1088, 1.442695
        %v1138 = vpow.pop %v1137
        %v1139 = vmul.f32 %v1089, 1.442695
        %v1140 = vpow.pop %v1139
        %v1141 = vmul.f32 %v1090, 1.442695
        %v1142 = vpow.pop %v1141
        %v1143 = vmul.f32 %v1091, 1.442695
        %v1144 = vpow.pop %v1143
        %v1145 = vmul.f32 %v1092, 1.442695
        %v1146 = vpow.pop %v1145
        %v1147 = vmul.f32 %v1093, 1.442695
        %v1148 = vpow.pop %v1147
        %v1149 = vmul.f32 %v1094, 1.442695
        %v1150 = vpow.pop %v1149
        %v1151 = vmul.f32 %v1095, 1.442695
        %v1152 = vpow.pop %v1151
        %v1153 = vmul.f32 %v1096, 1.442695
        %v1154 = vpow.pop %v1153
        %v1155 = vmul.f32 %v1097, 1.442695
        %v1156 = vpow.pop %v1155
        %v1157 = vmul.f32 %v1098, 1.442695
        %v1158 = vpow.pop %v1157
        %v1159 = vmul.f32 %v1099, 1.442695
        %v1160 = vpow.pop %v1159
        %v1161 = vmul.f32 %v1100, 1.442695
        %v1162 = vpow.pop %v1161
        %v1163 = vmul.f32 %v1101, 1.442695
        %v1164 = vpow.pop %v1163
        %v1165 = vmul.f32 %v1102, 1.442695
        %v1166 = vpow.pop %v1165
        %v1167 = vld [vmem:[#allocation3] sm:$0xff]
        %v1168 = vld [vmem:[#allocation3 + $0x8] sm:$0xff]
        %v1169 = vmul.f32 %v980, %v1167
        %v1170 = vmul.f32 %v982, %v1168
        %1203 = vset.pattern.permute.xlu0 0
        %1204 = vperm.xlu0 %1203, %v1104
        %v1205 = vpop.permute.xlu0 %1204
        %1206 = vset.pattern.permute.xlu0 0
        %1207 = vperm.xlu0 %1206, %v1106
        %v1208 = vpop.permute.xlu0 %1207
        %1209 = vset.pattern.permute.xlu0 0
        %1210 = vperm.xlu0 %1209, %v1108
        %v1211 = vpop.permute.xlu0 %1210
        %1212 = vset.pattern.permute.xlu0 0
        %1213 = vperm.xlu0 %1212, %v1110
        %v1214 = vpop.permute.xlu0 %1213
        %1215 = vset.pattern.permute.xlu0 0
        %1216 = vperm.xlu0 %1215, %v1112
        %v1217 = vpop.permute.xlu0 %1216
        %1218 = vset.pattern.permute.xlu0 0
        %1219 = vperm.xlu0 %1218, %v1114
        %v1220 = vpop.permute.xlu0 %1219
        %1221 = vset.pattern.permute.xlu0 0
        %1222 = vperm.xlu0 %1221, %v1116
        %v1223 = vpop.permute.xlu0 %1222
        %1224 = vset.pattern.permute.xlu0 0
        %1225 = vperm.xlu0 %1224, %v1118
        %v1226 = vpop.permute.xlu0 %1225
        %1227 = vset.pattern.permute.xlu0 0
        %1228 = vperm.xlu0 %1227, %v1120
        %v1229 = vpop.permute.xlu0 %1228
        %1230 = vset.pattern.permute.xlu0 0
        %1231 = vperm.xlu0 %1230, %v1122
        %v1232 = vpop.permute.xlu0 %1231
        %1233 = vset.pattern.permute.xlu0 0
        %1234 = vperm.xlu0 %1233, %v1124
        %v1235 = vpop.permute.xlu0 %1234
        %1236 = vset.pattern.permute.xlu0 0
        %1237 = vperm.xlu0 %1236, %v1126
        %v1238 = vpop.permute.xlu0 %1237
        %1239 = vset.pattern.permute.xlu0 0
        %1240 = vperm.xlu0 %1239, %v1128
        %v1241 = vpop.permute.xlu0 %1240
        %1242 = vset.pattern.permute.xlu0 0
        %1243 = vperm.xlu0 %1242, %v1130
        %v1244 = vpop.permute.xlu0 %1243
        %1245 = vset.pattern.permute.xlu0 0
        %1246 = vperm.xlu0 %1245, %v1132
        %v1247 = vpop.permute.xlu0 %1246
        %1248 = vset.pattern.permute.xlu0 0
        %1249 = vperm.xlu0 %1248, %v1134
        %v1250 = vpop.permute.xlu0 %1249
        %1251 = vset.pattern.permute.xlu0 0
        %1252 = vperm.xlu0 %1251, %v1136
        %v1253 = vpop.permute.xlu0 %1252
        %1254 = vset.pattern.permute.xlu0 0
        %1255 = vperm.xlu0 %1254, %v1138
        %v1256 = vpop.permute.xlu0 %1255
        %1257 = vset.pattern.permute.xlu0 0
        %1258 = vperm.xlu0 %1257, %v1140
        %v1259 = vpop.permute.xlu0 %1258
        %1260 = vset.pattern.permute.xlu0 0
        %1261 = vperm.xlu0 %1260, %v1142
        %v1262 = vpop.permute.xlu0 %1261
        %1263 = vset.pattern.permute.xlu0 0
        %1264 = vperm.xlu0 %1263, %v1144
        %v1265 = vpop.permute.xlu0 %1264
        %1266 = vset.pattern.permute.xlu0 0
        %1267 = vperm.xlu0 %1266, %v1146
        %v1268 = vpop.permute.xlu0 %1267
        %1269 = vset.pattern.permute.xlu0 0
        %1270 = vperm.xlu0 %1269, %v1148
        %v1271 = vpop.permute.xlu0 %1270
        %1272 = vset.pattern.permute.xlu0 0
        %1273 = vperm.xlu0 %1272, %v1150
        %v1274 = vpop.permute.xlu0 %1273
        %1275 = vset.pattern.permute.xlu0 0
        %1276 = vperm.xlu0 %1275, %v1152
        %v1277 = vpop.permute.xlu0 %1276
        %1278 = vset.pattern.permute.xlu0 0
        %1279 = vperm.xlu0 %1278, %v1154
        %v1280 = vpop.permute.xlu0 %1279
        %1281 = vset.pattern.permute.xlu0 0
        %1282 = vperm.xlu0 %1281, %v1156
        %v1283 = vpop.permute.xlu0 %1282
        %1284 = vset.pattern.permute.xlu0 0
        %1285 = vperm.xlu0 %1284, %v1158
        %v1286 = vpop.permute.xlu0 %1285
        %1287 = vset.pattern.permute.xlu0 0
        %1288 = vperm.xlu0 %1287, %v1160
        %v1289 = vpop.permute.xlu0 %1288
        %1290 = vset.pattern.permute.xlu0 0
        %1291 = vperm.xlu0 %1290, %v1162
        %v1292 = vpop.permute.xlu0 %1291
        %1293 = vset.pattern.permute.xlu0 0
        %1294 = vperm.xlu0 %1293, %v1164
        %v1295 = vpop.permute.xlu0 %1294
        %1296 = vset.pattern.permute.xlu0 0
        %1297 = vperm.xlu0 %1296, %v1166
        %v1298 = vpop.permute.xlu0 %1297
        %v1299 = vlaneseq
        %v1300 = vshrl.u32 %v1299, 7
        %v1301 = vsub.s32 %v799, %v1300
        %v1302 = vrot.slane %v1205, %v1301
        %v1303 = vlaneseq
        %v1304 = vshrl.u32 %v1303, 7
        %v1305 = vsub.s32 %v804, %v1304
        %v1306 = vrot.slane %v1208, %v1305
        %v1307 = vsel %vm809, %v1306, %v1302
        %v1308 = vlaneseq
        %v1309 = vshrl.u32 %v1308, 7
        %v1310 = vsub.s32 %v799, %v1309
        %v1311 = vrot.slane %v1211, %v1310
        %v1312 = vlaneseq
        %v1313 = vshrl.u32 %v1312, 7
        %v1314 = vsub.s32 %v804, %v1313
        %v1315 = vrot.slane %v1214, %v1314
        %v1316 = vsel %vm809, %v1315, %v1311
        %v1317 = vlaneseq
        %v1318 = vshrl.u32 %v1317, 7
        %v1319 = vsub.s32 %v799, %v1318
        %v1320 = vrot.slane %v1217, %v1319
        %v1321 = vlaneseq
        %v1322 = vshrl.u32 %v1321, 7
        %v1323 = vsub.s32 %v804, %v1322
        %v1324 = vrot.slane %v1220, %v1323
        %v1325 = vsel %vm809, %v1324, %v1320
        %v1326 = vlaneseq
        %v1327 = vshrl.u32 %v1326, 7
        %v1328 = vsub.s32 %v799, %v1327
        %v1329 = vrot.slane %v1223, %v1328
        %v1330 = vlaneseq
        %v1331 = vshrl.u32 %v1330, 7
        %v1332 = vsub.s32 %v804, %v1331
        %v1333 = vrot.slane %v1226, %v1332
        %v1334 = vsel %vm809, %v1333, %v1329
        %v1335 = vlaneseq
        %v1336 = vshrl.u32 %v1335, 7
        %v1337 = vsub.s32 %v799, %v1336
        %v1338 = vrot.slane %v1229, %v1337
        %v1339 = vlaneseq
        %v1340 = vshrl.u32 %v1339, 7
        %v1341 = vsub.s32 %v804, %v1340
        %v1342 = vrot.slane %v1232, %v1341
        %v1343 = vsel %vm809, %v1342, %v1338
        %v1344 = vlaneseq
        %v1345 = vshrl.u32 %v1344, 7
        %v1346 = vsub.s32 %v799, %v1345
        %v1347 = vrot.slane %v1235, %v1346
        %v1348 = vlaneseq
        %v1349 = vshrl.u32 %v1348, 7
        %v1350 = vsub.s32 %v804, %v1349
        %v1351 = vrot.slane %v1238, %v1350
        %v1352 = vsel %vm809, %v1351, %v1347
        %v1353 = vlaneseq
        %v1354 = vshrl.u32 %v1353, 7
        %v1355 = vsub.s32 %v799, %v1354
        %v1356 = vrot.slane %v1241, %v1355
        %v1357 = vlaneseq
        %v1358 = vshrl.u32 %v1357, 7
        %v1359 = vsub.s32 %v804, %v1358
        %v1360 = vrot.slane %v1244, %v1359
        %v1361 = vsel %vm809, %v1360, %v1356
        %v1362 = vlaneseq
        %v1363 = vshrl.u32 %v1362, 7
        %v1364 = vsub.s32 %v799, %v1363
        %v1365 = vrot.slane %v1247, %v1364
        %v1366 = vlaneseq
        %v1367 = vshrl.u32 %v1366, 7
        %v1368 = vsub.s32 %v804, %v1367
        %v1369 = vrot.slane %v1250, %v1368
        %v1370 = vsel %vm809, %v1369, %v1365
        %v1371 = vlaneseq
        %v1372 = vshrl.u32 %v1371, 7
        %v1373 = vsub.s32 %v799, %v1372
        %v1374 = vrot.slane %v1253, %v1373
        %v1375 = vlaneseq
        %v1376 = vshrl.u32 %v1375, 7
        %v1377 = vsub.s32 %v804, %v1376
        %v1378 = vrot.slane %v1256, %v1377
        %v1379 = vsel %vm809, %v1378, %v1374
        %v1380 = vlaneseq
        %v1381 = vshrl.u32 %v1380, 7
        %v1382 = vsub.s32 %v799, %v1381
        %v1383 = vrot.slane %v1259, %v1382
        %v1384 = vlaneseq
        %v1385 = vshrl.u32 %v1384, 7
        %v1386 = vsub.s32 %v804, %v1385
        %v1387 = vrot.slane %v1262, %v1386
        %v1388 = vsel %vm809, %v1387, %v1383
        %v1389 = vlaneseq
        %v1390 = vshrl.u32 %v1389, 7
        %v1391 = vsub.s32 %v799, %v1390
        %v1392 = vrot.slane %v1265, %v1391
        %v1393 = vlaneseq
        %v1394 = vshrl.u32 %v1393, 7
        %v1395 = vsub.s32 %v804, %v1394
        %v1396 = vrot.slane %v1268, %v1395
        %v1397 = vsel %vm809, %v1396, %v1392
        %v1398 = vlaneseq
        %v1399 = vshrl.u32 %v1398, 7
        %v1400 = vsub.s32 %v799, %v1399
        %v1401 = vrot.slane %v1271, %v1400
        %v1402 = vlaneseq
        %v1403 = vshrl.u32 %v1402, 7
        %v1404 = vsub.s32 %v804, %v1403
        %v1405 = vrot.slane %v1274, %v1404
        %v1406 = vsel %vm809, %v1405, %v1401
        %v1407 = vlaneseq
        %v1408 = vshrl.u32 %v1407, 7
        %v1409 = vsub.s32 %v799, %v1408
        %v1410 = vrot.slane %v1277, %v1409
        %v1411 = vlaneseq
        %v1412 = vshrl.u32 %v1411, 7
        %v1413 = vsub.s32 %v804, %v1412
        %v1414 = vrot.slane %v1280, %v1413
        %v1415 = vsel %vm809, %v1414, %v1410
        %v1416 = vlaneseq
        %v1417 = vshrl.u32 %v1416, 7
        %v1418 = vsub.s32 %v799, %v1417
        %v1419 = vrot.slane %v1283, %v1418
        %v1420 = vlaneseq
        %v1421 = vshrl.u32 %v1420, 7
        %v1422 = vsub.s32 %v804, %v1421
        %v1423 = vrot.slane %v1286, %v1422
        %v1424 = vsel %vm809, %v1423, %v1419
        %v1425 = vlaneseq
        %v1426 = vshrl.u32 %v1425, 7
        %v1427 = vsub.s32 %v799, %v1426
        %v1428 = vrot.slane %v1289, %v1427
        %v1429 = vlaneseq
        %v1430 = vshrl.u32 %v1429, 7
        %v1431 = vsub.s32 %v804, %v1430
        %v1432 = vrot.slane %v1292, %v1431
        %v1433 = vsel %vm809, %v1432, %v1428
        %v1434 = vlaneseq
        %v1435 = vshrl.u32 %v1434, 7
        %v1436 = vsub.s32 %v799, %v1435
        %v1437 = vrot.slane %v1295, %v1436
        %v1438 = vlaneseq
        %v1439 = vshrl.u32 %v1438, 7
        %v1440 = vsub.s32 %v804, %v1439
        %v1441 = vrot.slane %v1298, %v1440
        %v1442 = vsel %vm809, %v1441, %v1437
        %v1443 = vsel %vm946, %v1316, %v1307
        %v1444 = vsel %vm948, %v1325, %v1443
        %v1445 = vsel %vm950, %v1334, %v1444
        %v1446 = vsel %vm952, %v1343, %v1445
        %v1447 = vsel %vm954, %v1352, %v1446
        %v1448 = vsel %vm956, %v1361, %v1447
        %v1449 = vsel %vm958, %v1370, %v1448
        %v1450 = vsel %vm946, %v1388, %v1379
        %v1451 = vsel %vm948, %v1397, %v1450
        %v1452 = vsel %vm950, %v1406, %v1451
        %v1453 = vsel %vm952, %v1415, %v1452
        %v1454 = vsel %vm954, %v1424, %v1453
        %v1455 = vsel %vm956, %v1433, %v1454
        %v1456 = vsel %vm958, %v1442, %v1455
        %v1459 = vsel %vm417, %v1449, 0.0
        %1460 = vadd.xlane.f32.xlu0 %v1459
        %v1461 = vpop.xlane.xlu0 %1460
        %v1462 = vsel %vm417, %v1456, 0.0
        %1463 = vadd.xlane.f32.xlu0 %v1462
        %v1464 = vpop.xlane.xlu0 %1463
        %v1465 = vadd.f32 %v1169, %v1461
        %v1466 = vadd.f32 %v1170, %v1464
        %vm1467 = vcmask 7168
        %1468 = vst.msk [vmem:[#allocation3] sm:$0xff] %vm1467, %v1465
        %1469 = vst.msk [vmem:[#allocation3 + $0x8] sm:$0xff] %vm1467, %v1466
        %v1470 = vld [vmem:[#allocation4] sm:$0xff]
        %v1471 = vld [vmem:[#allocation4 + $0x8] sm:$0xff]
        %1473 = vset.pattern.permute.xlu0 0
        %1474 = vperm.xlu0 %1473, %v980
        %v1475 = vpop.permute.xlu0 %1474
        %1478 = vset.pattern.permute.xlu0 0
        %1479 = vperm.xlu0 %1478, %v982
        %v1480 = vpop.permute.xlu0 %1479
        %v1482 = vmul.f32 %v1475, %v1470
        %v1483 = vmul.f32 %v1480, %v1471
        %v1484 = vpack.c.bf16 %v1106, %v1104
        %v1485 = vpack.c.bf16 %v1110, %v1108
        %v1486 = vpack.c.bf16 %v1114, %v1112
        %v1487 = vpack.c.bf16 %v1118, %v1116
        %v1488 = vpack.c.bf16 %v1122, %v1120
        %v1489 = vpack.c.bf16 %v1126, %v1124
        %v1490 = vpack.c.bf16 %v1130, %v1128
        %v1491 = vpack.c.bf16 %v1134, %v1132
        %v1492 = vpack.c.bf16 %v1138, %v1136
        %v1493 = vpack.c.bf16 %v1142, %v1140
        %v1494 = vpack.c.bf16 %v1146, %v1144
        %v1495 = vpack.c.bf16 %v1150, %v1148
        %v1496 = vpack.c.bf16 %v1154, %v1152
        %v1497 = vpack.c.bf16 %v1158, %v1156
        %v1498 = vpack.c.bf16 %v1162, %v1160
        %v1499 = vpack.c.bf16 %v1166, %v1164
        %v1500 = vld [vmem:[%s348] sm:$0xf]
        %v1501 = vld [vmem:[%s348 + $0x4] sm:$0xf]
        %v1502 = vld [vmem:[%s348 + $0x8] sm:$0xf]
        %v1503 = vld [vmem:[%s348 + $0xc] sm:$0xf]
        %v1512 = vunpack.c.l.b16 %v1484
        %v1513 = vunpack.c.h.b16 %v1484
        %v1514 = vunpack.c.l.b16 %v1485
        %v1515 = vunpack.c.h.b16 %v1485
        %v1516 = vunpack.c.l.b16 %v1486
        %v1517 = vunpack.c.h.b16 %v1486
        %v1518 = vunpack.c.l.b16 %v1487
        %v1519 = vunpack.c.h.b16 %v1487
        %v1520 = vunpack.c.l.b16 %v1488
        %v1521 = vunpack.c.h.b16 %v1488
        %v1522 = vunpack.c.l.b16 %v1489
        %v1523 = vunpack.c.h.b16 %v1489
        %v1524 = vunpack.c.l.b16 %v1490
        %v1525 = vunpack.c.h.b16 %v1490
        %v1526 = vunpack.c.l.b16 %v1491
        %v1527 = vunpack.c.h.b16 %v1491
        %1528 = vset.pattern.permute.xlu0 0
        %1529 = vperm.xlu0 %1528, %v1512
        %v1530 = vpop.permute.xlu0 %1529
        %1531 = vset.pattern.permute.xlu0 0
        %1532 = vperm.xlu0 %1531, %v1513
        %v1533 = vpop.permute.xlu0 %1532
        %1534 = vset.pattern.permute.xlu0 0
        %1535 = vperm.xlu0 %1534, %v1514
        %v1536 = vpop.permute.xlu0 %1535
        %1537 = vset.pattern.permute.xlu0 0
        %1538 = vperm.xlu0 %1537, %v1515
        %v1539 = vpop.permute.xlu0 %1538
        %1540 = vset.pattern.permute.xlu0 0
        %1541 = vperm.xlu0 %1540, %v1516
        %v1542 = vpop.permute.xlu0 %1541
        %1543 = vset.pattern.permute.xlu0 0
        %1544 = vperm.xlu0 %1543, %v1517
        %v1545 = vpop.permute.xlu0 %1544
        %1546 = vset.pattern.permute.xlu0 0
        %1547 = vperm.xlu0 %1546, %v1518
        %v1548 = vpop.permute.xlu0 %1547
        %1549 = vset.pattern.permute.xlu0 0
        %1550 = vperm.xlu0 %1549, %v1519
        %v1551 = vpop.permute.xlu0 %1550
        %1552 = vset.pattern.permute.xlu0 0
        %1553 = vperm.xlu0 %1552, %v1520
        %v1554 = vpop.permute.xlu0 %1553
        %1555 = vset.pattern.permute.xlu0 0
        %1556 = vperm.xlu0 %1555, %v1521
        %v1557 = vpop.permute.xlu0 %1556
        %1558 = vset.pattern.permute.xlu0 0
        %1559 = vperm.xlu0 %1558, %v1522
        %v1560 = vpop.permute.xlu0 %1559
        %1561 = vset.pattern.permute.xlu0 0
        %1562 = vperm.xlu0 %1561, %v1523
        %v1563 = vpop.permute.xlu0 %1562
        %1564 = vset.pattern.permute.xlu0 0
        %1565 = vperm.xlu0 %1564, %v1524
        %v1566 = vpop.permute.xlu0 %1565
        %1567 = vset.pattern.permute.xlu0 0
        %1568 = vperm.xlu0 %1567, %v1525
        %v1569 = vpop.permute.xlu0 %1568
        %1570 = vset.pattern.permute.xlu0 0
        %1571 = vperm.xlu0 %1570, %v1526
        %v1572 = vpop.permute.xlu0 %1571
        %1573 = vset.pattern.permute.xlu0 0
        %1574 = vperm.xlu0 %1573, %v1527
        %v1575 = vpop.permute.xlu0 %1574
        %v1576 = vlaneseq
        %v1577 = vshrl.u32 %v1576, 7
        %v1578 = vsub.s32 %v799, %v1577
        %v1579 = vrot.slane %v1530, %v1578
        %v1580 = vlaneseq
        %v1581 = vshrl.u32 %v1580, 7
        %v1582 = vsub.s32 %v804, %v1581
        %v1583 = vrot.slane %v1533, %v1582
        %v1584 = vsel %vm809, %v1583, %v1579
        %v1585 = vlaneseq
        %v1586 = vshrl.u32 %v1585, 7
        %v1587 = vsub.s32 %v799, %v1586
        %v1588 = vrot.slane %v1536, %v1587
        %v1589 = vlaneseq
        %v1590 = vshrl.u32 %v1589, 7
        %v1591 = vsub.s32 %v804, %v1590
        %v1592 = vrot.slane %v1539, %v1591
        %v1593 = vsel %vm809, %v1592, %v1588
        %v1594 = vlaneseq
        %v1595 = vshrl.u32 %v1594, 7
        %v1596 = vsub.s32 %v799, %v1595
        %v1597 = vrot.slane %v1542, %v1596
        %v1598 = vlaneseq
        %v1599 = vshrl.u32 %v1598, 7
        %v1600 = vsub.s32 %v804, %v1599
        %v1601 = vrot.slane %v1545, %v1600
        %v1602 = vsel %vm809, %v1601, %v1597
        %v1603 = vlaneseq
        %v1604 = vshrl.u32 %v1603, 7
        %v1605 = vsub.s32 %v799, %v1604
        %v1606 = vrot.slane %v1548, %v1605
        %v1607 = vlaneseq
        %v1608 = vshrl.u32 %v1607, 7
        %v1609 = vsub.s32 %v804, %v1608
        %v1610 = vrot.slane %v1551, %v1609
        %v1611 = vsel %vm809, %v1610, %v1606
        %v1612 = vlaneseq
        %v1613 = vshrl.u32 %v1612, 7
        %v1614 = vsub.s32 %v799, %v1613
        %v1615 = vrot.slane %v1554, %v1614
        %v1616 = vlaneseq
        %v1617 = vshrl.u32 %v1616, 7
        %v1618 = vsub.s32 %v804, %v1617
        %v1619 = vrot.slane %v1557, %v1618
        %v1620 = vsel %vm809, %v1619, %v1615
        %v1621 = vlaneseq
        %v1622 = vshrl.u32 %v1621, 7
        %v1623 = vsub.s32 %v799, %v1622
        %v1624 = vrot.slane %v1560, %v1623
        %v1625 = vlaneseq
        %v1626 = vshrl.u32 %v1625, 7
        %v1627 = vsub.s32 %v804, %v1626
        %v1628 = vrot.slane %v1563, %v1627
        %v1629 = vsel %vm809, %v1628, %v1624
        %v1630 = vlaneseq
        %v1631 = vshrl.u32 %v1630, 7
        %v1632 = vsub.s32 %v799, %v1631
        %v1633 = vrot.slane %v1566, %v1632
        %v1634 = vlaneseq
        %v1635 = vshrl.u32 %v1634, 7
        %v1636 = vsub.s32 %v804, %v1635
        %v1637 = vrot.slane %v1569, %v1636
        %v1638 = vsel %vm809, %v1637, %v1633
        %v1639 = vlaneseq
        %v1640 = vshrl.u32 %v1639, 7
        %v1641 = vsub.s32 %v799, %v1640
        %v1642 = vrot.slane %v1572, %v1641
        %v1643 = vlaneseq
        %v1644 = vshrl.u32 %v1643, 7
        %v1645 = vsub.s32 %v804, %v1644
        %v1646 = vrot.slane %v1575, %v1645
        %v1647 = vsel %vm809, %v1646, %v1642
        %v1648 = vsel %vm946, %v1593, %v1584
        %v1649 = vsel %vm948, %v1602, %v1648
        %v1650 = vsel %vm950, %v1611, %v1649
        %v1651 = vsel %vm952, %v1620, %v1650
        %v1652 = vsel %vm954, %v1629, %v1651
        %v1653 = vsel %vm956, %v1638, %v1652
        %v1654 = vsel %vm958, %v1647, %v1653
        %v1655 = vpack.c.b16 %v1654, %v1654
        %v1658 = vunpack.c.l.b16 %v1500
        %v1659 = vunpack.c.l.b16 %v1501
        %v1660 = vpack.c.b16 %v1659, %v1658
        %v1663 = vsel %vm417, %v1655, 0
        %1665 = vmatprep.subr.bf16.mxu0 0
        %1666 = vmatpush1.bf16.msra.mxu0 0
        %1667 = vmatprep.subr.bf16.mxu0 0
        %1668 = vmatpush1.bf16.msra.mxu0 0
        %1669 = vmatprep.subr.bf16.mxu0 0
        %1670 = vmatpush1.bf16.msra.mxu0 0
        %1671 = vmatprep.subr.bf16.mxu0 0
        %1672 = vmatpush1.bf16.msra.mxu0 0
        %1673 = vmatprep.subr.bf16.mxu0 0
        %1674 = vmatpush1.bf16.msra.mxu0 0
        %1675 = vmatprep.subr.bf16.mxu0 0
        %1676 = vmatpush1.bf16.msra.mxu0 0
        %1677 = vmatprep.subr.bf16.mxu0 0
        %1678 = vmatpush1.bf16.msra.mxu0 0
        %1679 = vmatprep.subr.bf16.mxu0 0
        %1680 = vmatpush1.bf16.msra.mxu0 %v1660
        %1681 = vmatprep.subr.bf16.mxu0 0
        %1682 = vmatpush2.bf16.msra.mxu0 0
        %1683 = vmatprep.subr.bf16.mxu0 0
        %1684 = vmatpush2.bf16.msra.mxu0 0
        %1685 = vmatprep.subr.bf16.mxu0 0
        %1686 = vmatpush2.bf16.msra.mxu0 0
        %1687 = vmatprep.subr.bf16.mxu0 0
        %1688 = vmatpush2.bf16.msra.mxu0 0
        %1689 = vmatprep.subr.bf16.mxu0 0
        %1690 = vmatpush2.bf16.msra.mxu0 0
        %1691 = vmatprep.subr.bf16.mxu0 0
        %1692 = vmatpush2.bf16.msra.mxu0 0
        %1693 = vmatprep.subr.bf16.mxu0 0
        %1694 = vmatpush2.bf16.msra.mxu0 0
        %1695 = vmatprep.subr.bf16.mxu0 0
        %1696 = vmatpush2.bf16.msra.mxu0 0
        %1697 = vmatprep.mubr.bf16.mxu0 0
        %1698 = vmatmul.mubr.bf16.gmra.mxu0 %v1663
        %v1699 = vpop.f32.mrf.mxu0
        %v1700 = vadd.f32 0.0, %v1699
        %v1701 = vpop.f32.mrf.mxu0
        %v1702 = vpop.f32.mrf.mxu0
        %v1703 = vpop.f32.mrf.mxu0
        %1704 = vdwg.mxu0
        %v1713 = vunpack.c.l.b16 %v1492
        %v1714 = vunpack.c.h.b16 %v1492
        %v1715 = vunpack.c.l.b16 %v1493
        %v1716 = vunpack.c.h.b16 %v1493
        %v1717 = vunpack.c.l.b16 %v1494
        %v1718 = vunpack.c.h.b16 %v1494
        %v1719 = vunpack.c.l.b16 %v1495
        %v1720 = vunpack.c.h.b16 %v1495
        %v1721 = vunpack.c.l.b16 %v1496
        %v1722 = vunpack.c.h.b16 %v1496
        %v1723 = vunpack.c.l.b16 %v1497
        %v1724 = vunpack.c.h.b16 %v1497
        %v1725 = vunpack.c.l.b16 %v1498
        %v1726 = vunpack.c.h.b16 %v1498
        %v1727 = vunpack.c.l.b16 %v1499
        %v1728 = vunpack.c.h.b16 %v1499
        %1729 = vset.pattern.permute.xlu0 0
        %1730 = vperm.xlu0 %1729, %v1713
        %v1731 = vpop.permute.xlu0 %1730
        %1732 = vset.pattern.permute.xlu0 0
        %1733 = vperm.xlu0 %1732, %v1714
        %v1734 = vpop.permute.xlu0 %1733
        %1735 = vset.pattern.permute.xlu0 0
        %1736 = vperm.xlu0 %1735, %v1715
        %v1737 = vpop.permute.xlu0 %1736
        %1738 = vset.pattern.permute.xlu0 0
        %1739 = vperm.xlu0 %1738, %v1716
        %v1740 = vpop.permute.xlu0 %1739
        %1741 = vset.pattern.permute.xlu0 0
        %1742 = vperm.xlu0 %1741, %v1717
        %v1743 = vpop.permute.xlu0 %1742
        %1744 = vset.pattern.permute.xlu0 0
        %1745 = vperm.xlu0 %1744, %v1718
        %v1746 = vpop.permute.xlu0 %1745
        %1747 = vset.pattern.permute.xlu0 0
        %1748 = vperm.xlu0 %1747, %v1719
        %v1749 = vpop.permute.xlu0 %1748
        %1750 = vset.pattern.permute.xlu0 0
        %1751 = vperm.xlu0 %1750, %v1720
        %v1752 = vpop.permute.xlu0 %1751
        %1753 = vset.pattern.permute.xlu0 0
        %1754 = vperm.xlu0 %1753, %v1721
        %v1755 = vpop.permute.xlu0 %1754
        %1756 = vset.pattern.permute.xlu0 0
        %1757 = vperm.xlu0 %1756, %v1722
        %v1758 = vpop.permute.xlu0 %1757
        %1759 = vset.pattern.permute.xlu0 0
        %1760 = vperm.xlu0 %1759, %v1723
        %v1761 = vpop.permute.xlu0 %1760
        %1762 = vset.pattern.permute.xlu0 0
        %1763 = vperm.xlu0 %1762, %v1724
        %v1764 = vpop.permute.xlu0 %1763
        %1765 = vset.pattern.permute.xlu0 0
        %1766 = vperm.xlu0 %1765, %v1725
        %v1767 = vpop.permute.xlu0 %1766
        %1768 = vset.pattern.permute.xlu0 0
        %1769 = vperm.xlu0 %1768, %v1726
        %v1770 = vpop.permute.xlu0 %1769
        %1771 = vset.pattern.permute.xlu0 0
        %1772 = vperm.xlu0 %1771, %v1727
        %v1773 = vpop.permute.xlu0 %1772
        %1774 = vset.pattern.permute.xlu0 0
        %1775 = vperm.xlu0 %1774, %v1728
        %v1776 = vpop.permute.xlu0 %1775
        %v1777 = vlaneseq
        %v1778 = vshrl.u32 %v1777, 7
        %v1779 = vsub.s32 %v799, %v1778
        %v1780 = vrot.slane %v1731, %v1779
        %v1781 = vlaneseq
        %v1782 = vshrl.u32 %v1781, 7
        %v1783 = vsub.s32 %v804, %v1782
        %v1784 = vrot.slane %v1734, %v1783
        %v1785 = vsel %vm809, %v1784, %v1780
        %v1786 = vlaneseq
        %v1787 = vshrl.u32 %v1786, 7
        %v1788 = vsub.s32 %v799, %v1787
        %v1789 = vrot.slane %v1737, %v1788
        %v1790 = vlaneseq
        %v1791 = vshrl.u32 %v1790, 7
        %v1792 = vsub.s32 %v804, %v1791
        %v1793 = vrot.slane %v1740, %v1792
        %v1794 = vsel %vm809, %v1793, %v1789
        %v1795 = vlaneseq
        %v1796 = vshrl.u32 %v1795, 7
        %v1797 = vsub.s32 %v799, %v1796
        %v1798 = vrot.slane %v1743, %v1797
        %v1799 = vlaneseq
        %v1800 = vshrl.u32 %v1799, 7
        %v1801 = vsub.s32 %v804, %v1800
        %v1802 = vrot.slane %v1746, %v1801
        %v1803 = vsel %vm809, %v1802, %v1798
        %v1804 = vlaneseq
        %v1805 = vshrl.u32 %v1804, 7
        %v1806 = vsub.s32 %v799, %v1805
        %v1807 = vrot.slane %v1749, %v1806
        %v1808 = vlaneseq
        %v1809 = vshrl.u32 %v1808, 7
        %v1810 = vsub.s32 %v804, %v1809
        %v1811 = vrot.slane %v1752, %v1810
        %v1812 = vsel %vm809, %v1811, %v1807
        %v1813 = vlaneseq
        %v1814 = vshrl.u32 %v1813, 7
        %v1815 = vsub.s32 %v799, %v1814
        %v1816 = vrot.slane %v1755, %v1815
        %v1817 = vlaneseq
        %v1818 = vshrl.u32 %v1817, 7
        %v1819 = vsub.s32 %v804, %v1818
        %v1820 = vrot.slane %v1758, %v1819
        %v1821 = vsel %vm809, %v1820, %v1816
        %v1822 = vlaneseq
        %v1823 = vshrl.u32 %v1822, 7
        %v1824 = vsub.s32 %v799, %v1823
        %v1825 = vrot.slane %v1761, %v1824
        %v1826 = vlaneseq
        %v1827 = vshrl.u32 %v1826, 7
        %v1828 = vsub.s32 %v804, %v1827
        %v1829 = vrot.slane %v1764, %v1828
        %v1830 = vsel %vm809, %v1829, %v1825
        %v1831 = vlaneseq
        %v1832 = vshrl.u32 %v1831, 7
        %v1833 = vsub.s32 %v799, %v1832
        %v1834 = vrot.slane %v1767, %v1833
        %v1835 = vlaneseq
        %v1836 = vshrl.u32 %v1835, 7
        %v1837 = vsub.s32 %v804, %v1836
        %v1838 = vrot.slane %v1770, %v1837
        %v1839 = vsel %vm809, %v1838, %v1834
        %v1840 = vlaneseq
        %v1841 = vshrl.u32 %v1840, 7
        %v1842 = vsub.s32 %v799, %v1841
        %v1843 = vrot.slane %v1773, %v1842
        %v1844 = vlaneseq
        %v1845 = vshrl.u32 %v1844, 7
        %v1846 = vsub.s32 %v804, %v1845
        %v1847 = vrot.slane %v1776, %v1846
        %v1848 = vsel %vm809, %v1847, %v1843
        %v1849 = vsel %vm946, %v1794, %v1785
        %v1850 = vsel %vm948, %v1803, %v1849
        %v1851 = vsel %vm950, %v1812, %v1850
        %v1852 = vsel %vm952, %v1821, %v1851
        %v1853 = vsel %vm954, %v1830, %v1852
        %v1854 = vsel %vm956, %v1839, %v1853
        %v1855 = vsel %vm958, %v1848, %v1854
        %v1856 = vpack.c.b16 %v1855, %v1855
        %v1859 = vunpack.c.l.b16 %v1502
        %v1860 = vunpack.c.l.b16 %v1503
        %v1861 = vpack.c.b16 %v1860, %v1859
        %v1864 = vsel %vm417, %v1856, 0
        %1866 = vmatprep.subr.bf16.mxu0 0
        %1867 = vmatpush1.bf16.msra.mxu0 0
        %1868 = vmatprep.subr.bf16.mxu0 0
        %1869 = vmatpush1.bf16.msra.mxu0 0
        %1870 = vmatprep.subr.bf16.mxu0 0
        %1871 = vmatpush1.bf16.msra.mxu0 0
        %1872 = vmatprep.subr.bf16.mxu0 0
        %1873 = vmatpush1.bf16.msra.mxu0 0
        %1874 = vmatprep.subr.bf16.mxu0 0
        %1875 = vmatpush1.bf16.msra.mxu0 0
        %1876 = vmatprep.subr.bf16.mxu0 0
        %1877 = vmatpush1.bf16.msra.mxu0 0
        %1878 = vmatprep.subr.bf16.mxu0 0
        %1879 = vmatpush1.bf16.msra.mxu0 0
        %1880 = vmatprep.subr.bf16.mxu0 0
        %1881 = vmatpush1.bf16.msra.mxu0 %v1861
        %1882 = vmatprep.subr.bf16.mxu0 0
        %1883 = vmatpush2.bf16.msra.mxu0 0
        %1884 = vmatprep.subr.bf16.mxu0 0
        %1885 = vmatpush2.bf16.msra.mxu0 0
        %1886 = vmatprep.subr.bf16.mxu0 0
        %1887 = vmatpush2.bf16.msra.mxu0 0
        %1888 = vmatprep.subr.bf16.mxu0 0
        %1889 = vmatpush2.bf16.msra.mxu0 0
        %1890 = vmatprep.subr.bf16.mxu0 0
        %1891 = vmatpush2.bf16.msra.mxu0 0
        %1892 = vmatprep.subr.bf16.mxu0 0
        %1893 = vmatpush2.bf16.msra.mxu0 0
        %1894 = vmatprep.subr.bf16.mxu0 0
        %1895 = vmatpush2.bf16.msra.mxu0 0
        %1896 = vmatprep.subr.bf16.mxu0 0
        %1897 = vmatpush2.bf16.msra.mxu0 0
        %1898 = vmatprep.mubr.bf16.mxu0 0
        %1899 = vmatmul.mubr.bf16.gmra.mxu0 %v1864
        %v1900 = vpop.f32.mrf.mxu0
        %v1901 = vadd.f32 0.0, %v1900
        %v1902 = vpop.f32.mrf.mxu0
        %v1903 = vpop.f32.mrf.mxu0
        %v1904 = vpop.f32.mrf.mxu0
        %1905 = vdwg.mxu0
        %v1906 = vadd.f32 %v1482, %v1700
        %v1907 = vadd.f32 %v1483, %v1901
        %1908 = vst.msk [vmem:[#allocation4] sm:$0xff] %vm417, %v1906
        %1909 = vst.msk [vmem:[#allocation4 + $0x8] sm:$0xff] %vm417, %v1907
        %1910 = vst.msk [vmem:[#allocation2] sm:$0xff] %vm1467, %v975
        %1911 = vst.msk [vmem:[#allocation2 + $0x8] sm:$0xff] %vm1467, %v976
        %p1912 = scmp.eq.s32.totalorder %s24, 1
        // Predicated region
        $region127: #{tpu_custom_call.1} parent=113 // pred_check
          %p1913 = pneg %p1912
        $region128: #{tpu_custom_call.1} parent=113 // pred_check_branch
          %1915 = sbr.rel (%p1913) target = $region130
        $region129: #{tpu_custom_call.1} parent=113 // pred_region
          %v1916 = vld [vmem:[#allocation3] sm:$0xff]
          %v1917 = vld [vmem:[#allocation3 + $0x8] sm:$0xff]
          %v1918 = vrcp.pop %v1916
          %v1919 = vrcp.pop %v1917
          %v1920 = vld [vmem:[#allocation4] sm:$0xff]
          %v1921 = vld [vmem:[#allocation4 + $0x8] sm:$0xff]
          %1923 = vset.pattern.permute.xlu0 0
          %1924 = vperm.xlu0 %1923, %v1918
          %v1925 = vpop.permute.xlu0 %1924
          %1928 = vset.pattern.permute.xlu0 0
          %1929 = vperm.xlu0 %1928, %v1919
          %v1930 = vpop.permute.xlu0 %1929
          %v1932 = vmul.f32 %v1920, %v1925
          %v1933 = vmul.f32 %v1921, %v1930
          %1934 = vst.msk [vmem:[%s376] sm:$0xff] %vm417, %v1932
          %1935 = vst.msk [vmem:[%s376 + $0x8] sm:$0xff] %vm417, %v1933
        $region130: #{tpu_custom_call.1} parent=113 // pred_fallthru
          _
        %s1936 = sand.u32 %s158, 1
        %s1937 = scalar_lea.sflag [#allocation8], %s1936
        %s1938 = sand.u32 %s158, 1
        %s1939 = smul.addr %s1938, 16
        %s1940 = scalar_lea.vmem [#allocation7], %s1939
        // Predicated region
        $region131: #{tpu_custom_call.1} parent=113 // pred_check
          %p1941 = pneg %p168
        $region132: #{tpu_custom_call.1} parent=113 // pred_check_branch
          %1943 = sbr.rel (%p1941) target = $region134
        $region133: #{tpu_custom_call.1} parent=113 // pred_region
          %s1944 = smul.u32 2, %s23
          %s1946 = ssub.s32 256, 256
          %1947 = vsyncadd %s1937, %s1946
          %s1948 = smul.addr %s1944, 128
          %s1949 = scalar_lea.hbm %s5, %s1948
          %s1950 = sshll.u32 %s1940, 4
          %s1951 = int_to_ptr.vmem [resolvable:$true] %s1950
          %1956 = dma.vmem_to_hbm [thread:$0]  %s1951, 256, %s1949, %s1937, 128, 128, 8
        $region134: #{tpu_custom_call.1} parent=113 // pred_fallthru
          _
      $region114: #{tpu_custom_call.1} parent=5 // pred_fallthru
        _
      %p1957 = scmp.le.s32.totalorder 2, %s14
      // Predicated region
      $region135: #{tpu_custom_call.1} parent=5 // pred_check
        %p1958 = pneg %p1957
      $region136: #{tpu_custom_call.1} parent=5 // pred_check_branch
        %1960 = sbr.rel (%p1958) target = $region138
      $region137: #{tpu_custom_call.1} parent=5 // pred_region
        %s1961 = ssub.s32 %s14, 2
        // Predicated region
        $region139: #{tpu_custom_call.1} parent=137 // pred_check
          %p1962 = pneg %p174
        $region140: #{tpu_custom_call.1} parent=137 // pred_check_branch
          %1964 = sbr.rel (%p1962) target = $region142
        $region141: #{tpu_custom_call.1} parent=137 // pred_region
          %s1965 = sand.u32 %s159, 1
          %s1966 = scalar_lea.sflag [#allocation8], %s1965
          %s1967 = sand.u32 %s159, 1
          %s1968 = smul.addr %s1967, 16
          %s1969 = scalar_lea.vmem [#allocation7], %s1968
          %1970 = dma.done %s1966, 256
        $region142: #{tpu_custom_call.1} parent=137 // pred_fallthru
          _
      $region138: #{tpu_custom_call.1} parent=5 // pred_fallthru
        _
    $region6: #{tpu_custom_call.1} parent=1 // loop_footer
      %s18 = sadd.s32 1, %s14
    $region7: #{tpu_custom_call.1} parent=1 // loop_footer_branch
      %13 = sbr.rel target = $region3
    $region8: #{tpu_custom_call.1} parent=1 // loop_exit
      _
    %1971 = vsyncpa [#allocation8], 1
    %s1972 = scalar_lea.sflag [#allocation8], 1
    %1973 = vsyncpa %s1972, 1

</llo_original>
